<compile_context>
chip_gen: v7x
topology: tpu7x:2x2x1
jax: 0.10.0
libtpu: 0.0.40
codegen_flags: <defaults>
</compile_context>

<pallas_src>
import functools

import jax
import jax.numpy as jnp
from jax import lax
from jax.experimental import pallas as pl
from jax.experimental.pallas import tpu as pltpu


def _round_up(x, m):
    return (x + m - 1) // m * m


def _pick_tn(cpo):
    """Largest Cout tile (multiple of 128, <= 640) that divides cpo."""
    n_lanes = cpo // 128
    for n_co in range(1, n_lanes + 1):
        if n_lanes % n_co == 0 and (cpo // n_co) <= 640:
            return cpo // n_co
    return 128


def _conv_kernel(c0m_ref, c0h_ref, c1m_ref, c1h_ref, c2m_ref, c2h_ref,
                 w_ref, b_ref, o_ref, *, tr, owq, cp):
    """One (row-tile, Cout-tile) block of the stride-2 3x3 conv.

    cKm_ref: (2*tr, owq, cp) bf16  padded-input rows [2*r0, 2*r0+2*tr) of the
                                   column-tap plane for kw = K
    cKh_ref: (1, owq, cp)    bf16  halo row 2*r0 + 2*tr of the same plane
    w_ref:   (9, cp, tn)     bf16  per-tap weights for this Cout tile
    b_ref:   (1, tn)         f32   bias slice
    o_ref:   (tr*owq, tn)    f32   output tile, pixels flattened (row-major)
    """
    trq = tr * owq
    acc = None
    col_planes = ((c0m_ref, c0h_ref), (c1m_ref, c1h_ref), (c2m_ref, c2h_ref))
    for kw, (m_ref, h_ref) in enumerate(col_planes):
        m = m_ref[...].reshape(tr, 2, owq, cp)     # free major-dim split
        even = m[:, 0]                             # input rows 2*(r0+r)   -> kh = 0
        odd = m[:, 1]                              # input rows 2*(r0+r)+1 -> kh = 1
        if tr > 1:                                 # input rows 2*(r0+r)+2 -> kh = 2
            even_next = jnp.concatenate([even[1:], h_ref[...]], axis=0)
        else:
            even_next = h_ref[...]
        for kh, slab in enumerate((even, odd, even_next)):
            t = kh * 3 + kw
            contrib = jnp.dot(slab.reshape(trq, cp), w_ref[t],
                              preferred_element_type=jnp.float32)
            acc = contrib if acc is None else acc + contrib
    o_ref[...] = acc + b_ref[...]


def unet_downsample(x_nchw, w_oihw, b):
    """Conv2d(C, C, k=3, s=2, p=1) forward.  NCHW in / NCHW out."""
    N, C, H, W = x_nchw.shape
    KH = KW = 3
    S = 2
    P = 1
    OH = (H + 2 * P - KH) // S + 1
    OW = (W + 2 * P - KW) // S + 1

    Cp = _round_up(C, 128)       # input-channel pad: lane-aligned MXU K
    Cpo = _round_up(C, 128)      # output-channel pad: lane-dense stores
    TN = _pick_tn(Cpo)           # Cout tile
    n_co = Cpo // TN
    OWq = _round_up(OW, 16)      # padded output width (bf16 sublane packing)

    # Pixel rows per tile, sized so double-buffered tiles stay well inside VMEM.
    if Cp <= 256:
        trq_target = 1024
    elif Cp <= 640:
        trq_target = 512
    else:
        trq_target = 256
    TR = max(1, min(OH, trq_target // OWq))
    OHpad = _round_up(OH, TR)
    n_rt = OHpad // TR
    TRQ = TR * OWq

    rows = 2 * OHpad + 1         # padded-input rows kept per plane (incl. halo row)

    # --- XLA pre-pass: bf16 cast first, NCHW->NHWC, zero-pad, and split the
    # padded input into the three column-tap-aligned planes (kw = 0, 1, 2).
    xh = jnp.transpose(x_nchw.astype(jnp.bfloat16), (0, 2, 3, 1))          # (N,H,W,C)
    xp = jnp.pad(xh, ((0, 0),
                      (P, rows - P - H),
                      (P, 2 * OWq + 1 - P - W),
                      (0, Cp - C)))                                        # (N, rows, 2*OWq+1, Cp)
    xe0 = xp[:, :, 0:2 * OWq:2, :]        # padded col 2*ow     -> kw = 0 taps
    xo1 = xp[:, :, 1:2 * OWq:2, :]        # padded col 2*ow + 1 -> kw = 1 taps
    xe2 = xp[:, :, 2:2 * OWq + 1:2, :]    # padded col 2*ow + 2 -> kw = 2 taps
    # each plane: (N, rows, OWq, Cp) bf16

    # Weights OIHW -> (9, Cin, Cout), channel-padded; bias row padded.
    w_taps = jnp.transpose(w_oihw, (2, 3, 1, 0)).reshape(KH * KW, C, C)
    w_taps = jnp.pad(w_taps, ((0, 0), (0, Cp - C), (0, Cpo - C))).astype(jnp.bfloat16)
    b_row = jnp.pad(b.astype(jnp.float32).reshape(1, C), ((0, 0), (0, Cpo - C)))

    grid = (n_co, N, n_rt)       # Cout tiles outermost so weights stay resident

    def main_map(co, n, rt):     # 2*TR input rows of this row tile
        return (n, rt, 0, 0)

    def halo_map(co, n, rt):     # single halo row (block size 1 -> element index)
        return (n, (rt + 1) * 2 * TR, 0, 0)

    main_spec = pl.BlockSpec((None, 2 * TR, OWq, Cp), main_map)
    halo_spec = pl.BlockSpec((None, 1, OWq, Cp), halo_map)

    in_specs = [
        main_spec, halo_spec,                                   # kw = 0 plane
        main_spec, halo_spec,                                   # kw = 1 plane
        main_spec, halo_spec,                                   # kw = 2 plane
        pl.BlockSpec((KH * KW, Cp, TN), lambda co, n, rt: (0, 0, co)),   # weights
        pl.BlockSpec((1, TN), lambda co, n, rt: (0, co)),                # bias
    ]
    out_spec = pl.BlockSpec((None, TRQ, TN), lambda co, n, rt: (n, rt, co))

    # VMEM budget from the actual footprint (double-buffered inputs/outputs).
    in_b = 3 * 2 * (2 * TR) * OWq * Cp * 2 + 3 * 2 * OWq * Cp * 2
    w_b = 2 * KH * KW * Cp * TN * 2
    o_b = 2 * TRQ * TN * 4
    work_b = 4 * TRQ * Cp * 2 + 2 * TRQ * TN * 4
    vmem_limit = int(min(max(1.5 * (in_b + w_b + o_b + work_b) + (8 << 20),
                             32 << 20), 100 << 20))

    flops = 2 * N * OHpad * OWq * KH * KW * Cp * Cpo
    bytes_accessed = int(n_co * 3 * N * rows * OWq * Cp * 2
                         + KH * KW * Cp * Cpo * 2
                         + N * OHpad * OWq * Cpo * 4)

    kernel = functools.partial(_conv_kernel, tr=TR, owq=OWq, cp=Cp)

    out = pl.pallas_call(
        kernel,
        out_shape=jax.ShapeDtypeStruct((N, OHpad * OWq, Cpo), jnp.float32),
        grid=grid,
        in_specs=in_specs,
        out_specs=out_spec,
        compiler_params=pltpu.CompilerParams(
            dimension_semantics=("parallel", "parallel", "parallel"),
            vmem_limit_bytes=vmem_limit),
        cost_estimate=pl.CostEstimate(flops=flops, transcendentals=0,
                                      bytes_accessed=bytes_accessed),
    )(xe0, xe0, xo1, xo1, xe2, xe2, w_taps, b_row)

    # Drop row/col/channel padding, flatten back to NHWC, then NCHW.
    # TODO(synk): a NHWC downstream consumer could skip this transpose pass.
    y = out.reshape(N, OHpad, OWq, Cpo)[:, :OH, :OW, :C].transpose(0, 3, 1, 2)
    return y


def _reference_conv(x_nchw, w_oihw, b):
    y = lax.conv_general_dilated(
        x_nchw, w_oihw,
        window_strides=(2, 2),
        padding=((1, 1), (1, 1)),
        dimension_numbers=("NCHW", "OIHW", "NCHW"),
        precision=lax.Precision.HIGHEST,
    )
    return y + b.reshape(1, -1, 1, 1)


if __name__ == "__main__":
    key = jax.random.PRNGKey(0)
    k_x, k_w, k_b = jax.random.split(key, 3)

    N, C, H, W = 2, 4, 16, 16
    x = jax.random.normal(k_x, (N, C, H, W), dtype=jnp.float32)

    # Conv2d-style init: weight OIHW = (C, C, 3, 3), bias (C,)
    fan_in = C * 3 * 3
    bound = 1.0 / (fan_in ** 0.5)
    w = jax.random.uniform(k_w, (C, C, 3, 3), minval=-bound, maxval=bound,
                           dtype=jnp.float32)
    b = jax.random.uniform(k_b, (C,), minval=-bound, maxval=bound,
                           dtype=jnp.float32)

    y = jax.block_until_ready(unet_downsample(x, w, b))
    assert y.shape == (N, C, H // 2, W // 2), y.shape

    # Loose check vs the true f32 reference (kernel uses bf16 MXU operands).
    y_ref = jax.block_until_ready(_reference_conv(x, w, b))
    assert jnp.allclose(y, y_ref, atol=5e-2, rtol=5e-2), (
        "mismatch vs f32 reference, max abs err = "
        + str(float(jnp.max(jnp.abs(y - y_ref)))))

    # Tight check vs a reference computed on bf16-rounded inputs (f32 accum).
    xq = x.astype(jnp.bfloat16).astype(jnp.float32)
    wq = w.astype(jnp.bfloat16).astype(jnp.float32)
    y_ref_q = jax.block_until_ready(_reference_conv(xq, wq, b))
    assert jnp.allclose(y, y_ref_q, atol=1e-4, rtol=1e-4), (
        "mismatch vs bf16-quantized reference, max abs err = "
        + str(float(jnp.max(jnp.abs(y - y_ref_q)))))

    print("KERNEL_OK")
</pallas_src>

<mosaic_0001>
module attributes {stable_mosaic.version = 11 : i64} {
  func.func @_conv_kernel(%arg0: i32, %arg1: i32, %arg2: i32, %arg3: memref<1x16x16x128xbf16, #tpu.memory_space<vmem>>, %arg4: memref<1x1x16x128xbf16, #tpu.memory_space<vmem>>, %arg5: memref<1x16x16x128xbf16, #tpu.memory_space<vmem>>, %arg6: memref<1x1x16x128xbf16, #tpu.memory_space<vmem>>, %arg7: memref<1x16x16x128xbf16, #tpu.memory_space<vmem>>, %arg8: memref<1x1x16x128xbf16, #tpu.memory_space<vmem>>, %arg9: memref<9x128x128xbf16, #tpu.memory_space<vmem>>, %arg10: memref<1x128xf32, #tpu.memory_space<vmem>>, %arg11: memref<1x128x128xf32, #tpu.memory_space<vmem>>) attributes {dimension_semantics = [#tpu.dimension_semantics<parallel>, #tpu.dimension_semantics<parallel>, #tpu.dimension_semantics<parallel>], iteration_bounds = array<i64: 1, 2, 1>, scalar_prefetch = 0 : i64, scratch_operands = 0 : i64, tpu.core_type = #tpu.core_type<tc>, window_params = [{transform_indices = @transform_0, window_bounds = array<i64: 1, 16, 16, 128>}, {transform_indices = @transform_1, window_bounds = array<i64: 1, 1, 16, 128>}, {transform_indices = @transform_2, window_bounds = array<i64: 1, 16, 16, 128>}, {transform_indices = @transform_3, window_bounds = array<i64: 1, 1, 16, 128>}, {transform_indices = @transform_4, window_bounds = array<i64: 1, 16, 16, 128>}, {transform_indices = @transform_5, window_bounds = array<i64: 1, 1, 16, 128>}, {transform_indices = @transform_6, window_bounds = array<i64: 9, 128, 128>}, {transform_indices = @transform_7, window_bounds = array<i64: 1, 128>}, {transform_indices = @transform_8, window_bounds = array<i64: 1, 128, 128>}]} {
    %c0 = arith.constant 0 : index
    %c0_0 = arith.constant 0 : index
    %c0_1 = arith.constant 0 : index
    %c0_2 = arith.constant 0 : index
    %0 = vector.load %arg3[%c0, %c0_0, %c0_1, %c0_2] : memref<1x16x16x128xbf16, #tpu.memory_space<vmem>>, vector<1x16x16x128xbf16>
    %1 = vector.shape_cast %0 : vector<1x16x16x128xbf16> to vector<16x16x128xbf16>
    %2 = vector.shape_cast %1 : vector<16x16x128xbf16> to vector<8x2x16x128xbf16>
    %3 = vector.extract_strided_slice %2 {offsets = [0, 0, 0, 0], sizes = [8, 1, 16, 128], strides = [1, 1, 1, 1]} : vector<8x2x16x128xbf16> to vector<8x1x16x128xbf16>
    %4 = vector.shape_cast %3 : vector<8x1x16x128xbf16> to vector<8x16x128xbf16>
    %5 = vector.extract_strided_slice %2 {offsets = [0, 1, 0, 0], sizes = [8, 1, 16, 128], strides = [1, 1, 1, 1]} : vector<8x2x16x128xbf16> to vector<8x1x16x128xbf16>
    %6 = vector.shape_cast %5 : vector<8x1x16x128xbf16> to vector<8x16x128xbf16>
    %7 = vector.extract_strided_slice %4 {offsets = [1, 0, 0], sizes = [7, 16, 128], strides = [1, 1, 1]} : vector<8x16x128xbf16> to vector<7x16x128xbf16>
    %c0_3 = arith.constant 0 : index
    %c0_4 = arith.constant 0 : index
    %c0_5 = arith.constant 0 : index
    %c0_6 = arith.constant 0 : index
    %8 = vector.load %arg4[%c0_3, %c0_4, %c0_5, %c0_6] : memref<1x1x16x128xbf16, #tpu.memory_space<vmem>>, vector<1x1x16x128xbf16>
    %9 = vector.shape_cast %8 : vector<1x1x16x128xbf16> to vector<1x16x128xbf16>
    %10 = tpu.concatenate %7, %9 in 0 : vector<7x16x128xbf16>, vector<1x16x128xbf16> -> vector<8x16x128xbf16>
    %11 = vector.shape_cast %4 : vector<8x16x128xbf16> to vector<128x128xbf16>
    %c0_7 = arith.constant 0 : index
    %c0_8 = arith.constant 0 : index
    %c0_9 = arith.constant 0 : index
    %12 = vector.load %arg9[%c0_7, %c0_8, %c0_9] : memref<9x128x128xbf16, #tpu.memory_space<vmem>>, vector<1x128x128xbf16>
    %13 = vector.shape_cast %12 : vector<1x128x128xbf16> to vector<128x128xbf16>
    %cst = arith.constant dense<0.000000e+00> : vector<128x128xf32>
    %14 = tpu.matmul %11, %13, %cst {dimension_numbers = #tpu.dot_dimension_numbers<[1], [0], [0], [1], [0, 0, 1, 1], [], []>} : vector<128x128xbf16>, vector<128x128xbf16>, vector<128x128xf32> -> vector<128x128xf32>
    %15 = vector.shape_cast %6 : vector<8x16x128xbf16> to vector<128x128xbf16>
    %c3 = arith.constant 3 : index
    %c0_10 = arith.constant 0 : index
    %c0_11 = arith.constant 0 : index
    %16 = vector.load %arg9[%c3, %c0_10, %c0_11] : memref<9x128x128xbf16, #tpu.memory_space<vmem>>, vector<1x128x128xbf16>
    %17 = vector.shape_cast %16 : vector<1x128x128xbf16> to vector<128x128xbf16>
    %cst_12 = arith.constant dense<0.000000e+00> : vector<128x128xf32>
    %18 = tpu.matmul %15, %17, %cst_12 {dimension_numbers = #tpu.dot_dimension_numbers<[1], [0], [0], [1], [0, 0, 1, 1], [], []>} : vector<128x128xbf16>, vector<128x128xbf16>, vector<128x128xf32> -> vector<128x128xf32>
    %19 = arith.addf %14, %18 : vector<128x128xf32>
    %20 = vector.shape_cast %10 : vector<8x16x128xbf16> to vector<128x128xbf16>
    %c6 = arith.constant 6 : index
    %c0_13 = arith.constant 0 : index
    %c0_14 = arith.constant 0 : index
    %21 = vector.load %arg9[%c6, %c0_13, %c0_14] : memref<9x128x128xbf16, #tpu.memory_space<vmem>>, vector<1x128x128xbf16>
    %22 = vector.shape_cast %21 : vector<1x128x128xbf16> to vector<128x128xbf16>
    %cst_15 = arith.constant dense<0.000000e+00> : vector<128x128xf32>
    %23 = tpu.matmul %20, %22, %cst_15 {dimension_numbers = #tpu.dot_dimension_numbers<[1], [0], [0], [1], [0, 0, 1, 1], [], []>} : vector<128x128xbf16>, vector<128x128xbf16>, vector<128x128xf32> -> vector<128x128xf32>
    %24 = arith.addf %19, %23 : vector<128x128xf32>
    %c0_16 = arith.constant 0 : index
    %c0_17 = arith.constant 0 : index
    %c0_18 = arith.constant 0 : index
    %c0_19 = arith.constant 0 : index
    %25 = vector.load %arg5[%c0_16, %c0_17, %c0_18, %c0_19] : memref<1x16x16x128xbf16, #tpu.memory_space<vmem>>, vector<1x16x16x128xbf16>
    %26 = vector.shape_cast %25 : vector<1x16x16x128xbf16> to vector<16x16x128xbf16>
    %27 = vector.shape_cast %26 : vector<16x16x128xbf16> to vector<8x2x16x128xbf16>
    %28 = vector.extract_strided_slice %27 {offsets = [0, 0, 0, 0], sizes = [8, 1, 16, 128], strides = [1, 1, 1, 1]} : vector<8x2x16x128xbf16> to vector<8x1x16x128xbf16>
    %29 = vector.shape_cast %28 : vector<8x1x16x128xbf16> to vector<8x16x128xbf16>
    %30 = vector.extract_strided_slice %27 {offsets = [0, 1, 0, 0], sizes = [8, 1, 16, 128], strides = [1, 1, 1, 1]} : vector<8x2x16x128xbf16> to vector<8x1x16x128xbf16>
    %31 = vector.shape_cast %30 : vector<8x1x16x128xbf16> to vector<8x16x128xbf16>
    %32 = vector.extract_strided_slice %29 {offsets = [1, 0, 0], sizes = [7, 16, 128], strides = [1, 1, 1]} : vector<8x16x128xbf16> to vector<7x16x128xbf16>
    %c0_20 = arith.constant 0 : index
    %c0_21 = arith.constant 0 : index
    %c0_22 = arith.constant 0 : index
    %c0_23 = arith.constant 0 : index
    %33 = vector.load %arg6[%c0_20, %c0_21, %c0_22, %c0_23] : memref<1x1x16x128xbf16, #tpu.memory_space<vmem>>, vector<1x1x16x128xbf16>
    %34 = vector.shape_cast %33 : vector<1x1x16x128xbf16> to vector<1x16x128xbf16>
    %35 = tpu.concatenate %32, %34 in 0 : vector<7x16x128xbf16>, vector<1x16x128xbf16> -> vector<8x16x128xbf16>
    %36 = vector.shape_cast %29 : vector<8x16x128xbf16> to vector<128x128xbf16>
    %c1 = arith.constant 1 : index
    %c0_24 = arith.constant 0 : index
    %c0_25 = arith.constant 0 : index
    %37 = vector.load %arg9[%c1, %c0_24, %c0_25] : memref<9x128x128xbf16, #tpu.memory_space<vmem>>, vector<1x128x128xbf16>
    %38 = vector.shape_cast %37 : vector<1x128x128xbf16> to vector<128x128xbf16>
    %cst_26 = arith.constant dense<0.000000e+00> : vector<128x128xf32>
    %39 = tpu.matmul %36, %38, %cst_26 {dimension_numbers = #tpu.dot_dimension_numbers<[1], [0], [0], [1], [0, 0, 1, 1], [], []>} : vector<128x128xbf16>, vector<128x128xbf16>, vector<128x128xf32> -> vector<128x128xf32>
    %40 = arith.addf %24, %39 : vector<128x128xf32>
    %41 = vector.shape_cast %31 : vector<8x16x128xbf16> to vector<128x128xbf16>
    %c4 = arith.constant 4 : index
    %c0_27 = arith.constant 0 : index
    %c0_28 = arith.constant 0 : index
    %42 = vector.load %arg9[%c4, %c0_27, %c0_28] : memref<9x128x128xbf16, #tpu.memory_space<vmem>>, vector<1x128x128xbf16>
    %43 = vector.shape_cast %42 : vector<1x128x128xbf16> to vector<128x128xbf16>
    %cst_29 = arith.constant dense<0.000000e+00> : vector<128x128xf32>
    %44 = tpu.matmul %41, %43, %cst_29 {dimension_numbers = #tpu.dot_dimension_numbers<[1], [0], [0], [1], [0, 0, 1, 1], [], []>} : vector<128x128xbf16>, vector<128x128xbf16>, vector<128x128xf32> -> vector<128x128xf32>
    %45 = arith.addf %40, %44 : vector<128x128xf32>
    %46 = vector.shape_cast %35 : vector<8x16x128xbf16> to vector<128x128xbf16>
    %c7 = arith.constant 7 : index
    %c0_30 = arith.constant 0 : index
    %c0_31 = arith.constant 0 : index
    %47 = vector.load %arg9[%c7, %c0_30, %c0_31] : memref<9x128x128xbf16, #tpu.memory_space<vmem>>, vector<1x128x128xbf16>
    %48 = vector.shape_cast %47 : vector<1x128x128xbf16> to vector<128x128xbf16>
    %cst_32 = arith.constant dense<0.000000e+00> : vector<128x128xf32>
    %49 = tpu.matmul %46, %48, %cst_32 {dimension_numbers = #tpu.dot_dimension_numbers<[1], [0], [0], [1], [0, 0, 1, 1], [], []>} : vector<128x128xbf16>, vector<128x128xbf16>, vector<128x128xf32> -> vector<128x128xf32>
    %50 = arith.addf %45, %49 : vector<128x128xf32>
    %c0_33 = arith.constant 0 : index
    %c0_34 = arith.constant 0 : index
    %c0_35 = arith.constant 0 : index
    %c0_36 = arith.constant 0 : index
    %51 = vector.load %arg7[%c0_33, %c0_34, %c0_35, %c0_36] : memref<1x16x16x128xbf16, #tpu.memory_space<vmem>>, vector<1x16x16x128xbf16>
    %52 = vector.shape_cast %51 : vector<1x16x16x128xbf16> to vector<16x16x128xbf16>
    %53 = vector.shape_cast %52 : vector<16x16x128xbf16> to vector<8x2x16x128xbf16>
    %54 = vector.extract_strided_slice %53 {offsets = [0, 0, 0, 0], sizes = [8, 1, 16, 128], strides = [1, 1, 1, 1]} : vector<8x2x16x128xbf16> to vector<8x1x16x128xbf16>
    %55 = vector.shape_cast %54 : vector<8x1x16x128xbf16> to vector<8x16x128xbf16>
    %56 = vector.extract_strided_slice %53 {offsets = [0, 1, 0, 0], sizes = [8, 1, 16, 128], strides = [1, 1, 1, 1]} : vector<8x2x16x128xbf16> to vector<8x1x16x128xbf16>
    %57 = vector.shape_cast %56 : vector<8x1x16x128xbf16> to vector<8x16x128xbf16>
    %58 = vector.extract_strided_slice %55 {offsets = [1, 0, 0], sizes = [7, 16, 128], strides = [1, 1, 1]} : vector<8x16x128xbf16> to vector<7x16x128xbf16>
    %c0_37 = arith.constant 0 : index
    %c0_38 = arith.constant 0 : index
    %c0_39 = arith.constant 0 : index
    %c0_40 = arith.constant 0 : index
    %59 = vector.load %arg8[%c0_37, %c0_38, %c0_39, %c0_40] : memref<1x1x16x128xbf16, #tpu.memory_space<vmem>>, vector<1x1x16x128xbf16>
    %60 = vector.shape_cast %59 : vector<1x1x16x128xbf16> to vector<1x16x128xbf16>
    %61 = tpu.concatenate %58, %60 in 0 : vector<7x16x128xbf16>, vector<1x16x128xbf16> -> vector<8x16x128xbf16>
    %62 = vector.shape_cast %55 : vector<8x16x128xbf16> to vector<128x128xbf16>
    %c2 = arith.constant 2 : index
    %c0_41 = arith.constant 0 : index
    %c0_42 = arith.constant 0 : index
    %63 = vector.load %arg9[%c2, %c0_41, %c0_42] : memref<9x128x128xbf16, #tpu.memory_space<vmem>>, vector<1x128x128xbf16>
    %64 = vector.shape_cast %63 : vector<1x128x128xbf16> to vector<128x128xbf16>
    %cst_43 = arith.constant dense<0.000000e+00> : vector<128x128xf32>
    %65 = tpu.matmul %62, %64, %cst_43 {dimension_numbers = #tpu.dot_dimension_numbers<[1], [0], [0], [1], [0, 0, 1, 1], [], []>} : vector<128x128xbf16>, vector<128x128xbf16>, vector<128x128xf32> -> vector<128x128xf32>
    %66 = arith.addf %50, %65 : vector<128x128xf32>
    %67 = vector.shape_cast %57 : vector<8x16x128xbf16> to vector<128x128xbf16>
    %c5 = arith.constant 5 : index
    %c0_44 = arith.constant 0 : index
    %c0_45 = arith.constant 0 : index
    %68 = vector.load %arg9[%c5, %c0_44, %c0_45] : memref<9x128x128xbf16, #tpu.memory_space<vmem>>, vector<1x128x128xbf16>
    %69 = vector.shape_cast %68 : vector<1x128x128xbf16> to vector<128x128xbf16>
    %cst_46 = arith.constant dense<0.000000e+00> : vector<128x128xf32>
    %70 = tpu.matmul %67, %69, %cst_46 {dimension_numbers = #tpu.dot_dimension_numbers<[1], [0], [0], [1], [0, 0, 1, 1], [], []>} : vector<128x128xbf16>, vector<128x128xbf16>, vector<128x128xf32> -> vector<128x128xf32>
    %71 = arith.addf %66, %70 : vector<128x128xf32>
    %72 = vector.shape_cast %61 : vector<8x16x128xbf16> to vector<128x128xbf16>
    %c8 = arith.constant 8 : index
    %c0_47 = arith.constant 0 : index
    %c0_48 = arith.constant 0 : index
    %73 = vector.load %arg9[%c8, %c0_47, %c0_48] : memref<9x128x128xbf16, #tpu.memory_space<vmem>>, vector<1x128x128xbf16>
    %74 = vector.shape_cast %73 : vector<1x128x128xbf16> to vector<128x128xbf16>
    %cst_49 = arith.constant dense<0.000000e+00> : vector<128x128xf32>
    %75 = tpu.matmul %72, %74, %cst_49 {dimension_numbers = #tpu.dot_dimension_numbers<[1], [0], [0], [1], [0, 0, 1, 1], [], []>} : vector<128x128xbf16>, vector<128x128xbf16>, vector<128x128xf32> -> vector<128x128xf32>
    %76 = arith.addf %71, %75 : vector<128x128xf32>
    %c0_50 = arith.constant 0 : index
    %c0_51 = arith.constant 0 : index
    %77 = vector.load %arg10[%c0_50, %c0_51] : memref<1x128xf32, #tpu.memory_space<vmem>>, vector<1x128xf32>
    %78 = vector.broadcast %77 : vector<1x128xf32> to vector<128x128xf32>
    %79 = arith.addf %76, %78 : vector<128x128xf32>
    %c0_52 = arith.constant 0 : index
    %c0_53 = arith.constant 0 : index
    %c0_54 = arith.constant 0 : index
    %80 = vector.load %arg11[%c0_52, %c0_53, %c0_54] : memref<1x128x128xf32, #tpu.memory_space<vmem>>, vector<1x128x128xf32>
    %81 = vector.shape_cast %80 : vector<1x128x128xf32> to vector<128x128xf32>
    %82 = vector.shape_cast %79 : vector<128x128xf32> to vector<1x128x128xf32>
    tpu.vector_store %arg11[%c0_52, %c0_53, %c0_54], %82 {strides = array<i32>} : memref<1x128x128xf32, #tpu.memory_space<vmem>>, vector<1x128x128xf32>,
    return
  }
  func.func @transform_0(%arg0: i32, %arg1: i32, %arg2: i32) -> (i32, i32, i32, i32) {
    %c0_i32 = arith.constant 0 : i32
    %c0_i32_0 = arith.constant 0 : i32
    %c0_i32_1 = arith.constant 0 : i32
    return %arg1, %arg2, %c0_i32, %c0_i32_0 : i32, i32, i32, i32
  }
  func.func @transform_1(%arg0: i32, %arg1: i32, %arg2: i32) -> (i32, i32, i32, i32) {
    %c1_i32 = arith.constant 1 : i32
    %0 = arith.addi %arg2, %c1_i32 : i32
    %c2_i32 = arith.constant 2 : i32
    %1 = arith.muli %0, %c2_i32 : i32
    %c8_i32 = arith.constant 8 : i32
    %2 = arith.muli %1, %c8_i32 : i32
    %c0_i32 = arith.constant 0 : i32
    %c0_i32_0 = arith.constant 0 : i32
    %c0_i32_1 = arith.constant 0 : i32
    return %arg1, %2, %c0_i32, %c0_i32_0 : i32, i32, i32, i32
  }
  func.func @transform_2(%arg0: i32, %arg1: i32, %arg2: i32) -> (i32, i32, i32, i32) {
    %c0_i32 = arith.constant 0 : i32
    %c0_i32_0 = arith.constant 0 : i32
    %c0_i32_1 = arith.constant 0 : i32
    return %arg1, %arg2, %c0_i32, %c0_i32_0 : i32, i32, i32, i32
  }
  func.func @transform_3(%arg0: i32, %arg1: i32, %arg2: i32) -> (i32, i32, i32, i32) {
    %c1_i32 = arith.constant 1 : i32
    %0 = arith.addi %arg2, %c1_i32 : i32
    %c2_i32 = arith.constant 2 : i32
    %1 = arith.muli %0, %c2_i32 : i32
    %c8_i32 = arith.constant 8 : i32
    %2 = arith.muli %1, %c8_i32 : i32
    %c0_i32 = arith.constant 0 : i32
    %c0_i32_0 = arith.constant 0 : i32
    %c0_i32_1 = arith.constant 0 : i32
    return %arg1, %2, %c0_i32, %c0_i32_0 : i32, i32, i32, i32
  }
  func.func @transform_4(%arg0: i32, %arg1: i32, %arg2: i32) -> (i32, i32, i32, i32) {
    %c0_i32 = arith.constant 0 : i32
    %c0_i32_0 = arith.constant 0 : i32
    %c0_i32_1 = arith.constant 0 : i32
    return %arg1, %arg2, %c0_i32, %c0_i32_0 : i32, i32, i32, i32
  }
  func.func @transform_5(%arg0: i32, %arg1: i32, %arg2: i32) -> (i32, i32, i32, i32) {
    %c1_i32 = arith.constant 1 : i32
    %0 = arith.addi %arg2, %c1_i32 : i32
    %c2_i32 = arith.constant 2 : i32
    %1 = arith.muli %0, %c2_i32 : i32
    %c8_i32 = arith.constant 8 : i32
    %2 = arith.muli %1, %c8_i32 : i32
    %c0_i32 = arith.constant 0 : i32
    %c0_i32_0 = arith.constant 0 : i32
    %c0_i32_1 = arith.constant 0 : i32
    return %arg1, %2, %c0_i32, %c0_i32_0 : i32, i32, i32, i32
  }
  func.func @transform_6(%arg0: i32, %arg1: i32, %arg2: i32) -> (i32, i32, i32) {
    %c0_i32 = arith.constant 0 : i32
    %c0_i32_0 = arith.constant 0 : i32
    %c0_i32_1 = arith.constant 0 : i32
    return %c0_i32, %c0_i32_0, %arg0 : i32, i32, i32
  }
  func.func @transform_7(%arg0: i32, %arg1: i32, %arg2: i32) -> (i32, i32) {
    %c0_i32 = arith.constant 0 : i32
    %c0_i32_0 = arith.constant 0 : i32
    return %c0_i32, %arg0 : i32, i32
  }
  func.func @transform_8(%arg0: i32, %arg1: i32, %arg2: i32) -> (i32, i32, i32) {
    %c0_i32 = arith.constant 0 : i32
    return %arg1, %arg2, %arg0 : i32, i32, i32
  }
}

</mosaic_0001>

<llo_original>
// kernel: tpu_custom_call.1
$region0: #{tpu_custom_call.1}
  #allocation0 [shape = 'u32[]', space=smem, size = 0x4, offset = 0x4, fixed_abs, tag = 'smem constant byte address 0x4 - core index']
  #allocation1 [shape = 'u32[144,128]{1,0:T(1,128)}', space=vmem, size = 0x12000, scoped, tag = 'internal scratch']
  %s0 = inlined_call_operand.hbm [shape: bf16[2,17,16,128], index: 0, kind: input, shape index: {}]
  %s1 = inlined_call_operand.hbm [shape: bf16[2,17,16,128], index: 1, kind: input, shape index: {}]
  %s2 = inlined_call_operand.hbm [shape: bf16[2,17,16,128], index: 2, kind: input, shape index: {}]
  %s3 = inlined_call_operand.hbm [shape: bf16[2,17,16,128], index: 3, kind: input, shape index: {}]
  %s4 = inlined_call_operand.hbm [shape: bf16[2,17,16,128], index: 4, kind: input, shape index: {}]
  %s5 = inlined_call_operand.hbm [shape: bf16[2,17,16,128], index: 5, kind: input, shape index: {}]
  %s6 = inlined_call_operand.hbm [shape: bf16[9,128,128], index: 6, kind: input, shape index: {}]
  %s7 = inlined_call_operand.vmem [shape: f32[1,128], index: 7, kind: input, shape index: {}]
  %s8 = inlined_call_operand.hbm [shape: f32[2,128,128], index: 8, kind: output, shape index: {}]
  %s9 = sld [smem:[#allocation0]]
  $region93: #{tpu_custom_call.1} parent=0
    _
  %s11 = ssub.s32 1, %s9
  %s12 = scalar_select 0, %s11, %s9
  $region1: #{tpu_custom_call.1} parent=0
    #allocation2 [shape = 'u8[131072]{0}', space=vmem, size = 0x20000, scoped, tag = 'input window, operand 0']
    #allocation3 [shape = 's32[2]{0}', space=sflag, size = 0x8, scoped, tag = 'scoped memory for tpu_custom_call.1']
    #allocation4 [shape = 's32[2]{0}', space=sflag, size = 0x8, scoped, tag = 'scoped memory for tpu_custom_call.1']
    #allocation5 [shape = 'u8[8192]{0}', space=vmem, size = 0x2000, scoped, tag = 'input window, operand 1']
    #allocation6 [shape = 's32[2]{0}', space=sflag, size = 0x8, scoped, tag = 'scoped memory for tpu_custom_call.1']
    #allocation7 [shape = 'u8[131072]{0}', space=vmem, size = 0x20000, scoped, tag = 'input window, operand 2']
    #allocation8 [shape = 'u8[8192]{0}', space=vmem, size = 0x2000, scoped, tag = 'input window, operand 3']
    #allocation9 [shape = 's32[2]{0}', space=sflag, size = 0x8, scoped, tag = 'scoped memory for tpu_custom_call.1']
    #allocation10 [shape = 'u8[131072]{0}', space=vmem, size = 0x20000, scoped, tag = 'input window, operand 4']
    #allocation11 [shape = 'u8[8192]{0}', space=vmem, size = 0x2000, scoped, tag = 'input window, operand 5']
    #allocation12 [shape = 's32[2]{0}', space=sflag, size = 0x8, scoped, tag = 'scoped memory for tpu_custom_call.1']
    #allocation13 [shape = 'u8[294912]{0}', space=vmem, size = 0x48000, scoped, tag = 'input window, operand 6, single buffered']
    #allocation14 [shape = 'u8[131072]{0}', space=vmem, size = 0x20000, scoped, tag = 'output window, operand 0']
    %13 = vsyncpa [#allocation3], 0
    %s14 = scalar_lea.sflag [#allocation3], 1
    %15 = vsyncpa %s14, 0
    %16 = vsyncpa [#allocation6], 0
    %s17 = scalar_lea.sflag [#allocation6], 1
    %18 = vsyncpa %s17, 0
    %19 = vsyncpa [#allocation9], 0
    %s20 = scalar_lea.sflag [#allocation9], 1
    %21 = vsyncpa %s20, 0
    %22 = vsyncpa [#allocation12], 0
    %s23 = scalar_lea.sflag [#allocation12], 1
    %24 = vsyncpa %s23, 0
    %25 = vsyncpa [#allocation4], 0
    %s26 = scalar_lea.sflag [#allocation4], 1
    %27 = vsyncpa %s26, 0
    loop: start=0, step=1, limit=4
    $region2: #{tpu_custom_call.1} parent=1 // loop_pre_header
      _
    $region3: #{tpu_custom_call.1} parent=1 // loop_header
      %s29 = sphi 0, %s33
      %p30 = scmp.ge.s32.totalorder %s29, 4
      %s36 = sphi 0, %s55
      %s37 = sphi 0, %s51
      %s38 = sphi 0, %s47
      %s39 = sphi 0, %s36
      %s40 = sphi 0, %s37
      %s41 = sphi 0, %s38
      %s42 = sphi 0, %s39
      %s43 = sphi 0, %s40
      %s44 = sphi 0, %s41
      %s60 = sphi 0, %s62
      %s63 = sphi 0, %s60
      %s64 = sphi 0, %s63
      %s80 = sphi 0, %s64
      %s92 = sphi 0, %s94
      %s95 = sphi 0, %s92
      %s96 = sphi 0, %s95
      %s112 = sphi 0, %s96
      %s120 = sphi 0, %s122
      %s123 = sphi 0, %s120
      %s124 = sphi 0, %s123
      %s140 = sphi 0, %s124
      %s152 = sphi 0, %s154
      %s155 = sphi 0, %s152
      %s156 = sphi 0, %s155
      %s172 = sphi 0, %s156
      %s180 = sphi 0, %s182
      %s183 = sphi 0, %s180
      %s184 = sphi 0, %s183
      %s200 = sphi 0, %s184
      %s212 = sphi 0, %s214
      %s215 = sphi 0, %s212
      %s216 = sphi 0, %s215
      %s232 = sphi 0, %s216
      %s238 = sphi 0, %s240
      %s241 = sphi 0, %s238
      %s242 = sphi 0, %s241
      %s258 = sphi 0, %s242
      %s264 = sphi 0, %s266
      %s267 = sphi 0, %s264
      %s268 = sphi 0, %s267
      %s284 = sphi 0, %s268
      %s294 = sphi 0, %s296
      %s297 = sphi 0, %s294
      %s298 = sphi 0, %s297
      %s314 = sphi 0, %s298
    $region4: #{tpu_custom_call.1} parent=1 // loop_header_branch
      %32 = sbr.rel (%p30) target = $region8
    $region5: #{tpu_custom_call.1} parent=1 // loop_body
      %s34 = ssub.s32 %s29, 1
      %s35 = ssub.s32 %s29, 2
      %s45 = sadd.s32 1, %s38
      %p46 = scmp.ge.s32.totalorder %s45, 1
      %s47 = scalar_select %p46, 0, %s45
      %s48 = sadd.s32 1, %s37
      %s49 = scalar_select %p46, %s48, %s37
      %p50 = scmp.ge.s32.totalorder %s49, 2
      %s51 = scalar_select %p50, 0, %s49
      %s52 = sadd.s32 1, %s36
      %s53 = scalar_select %p50, %s52, %s36
      %p54 = scmp.ge.s32.totalorder %s53, 1
      %s55 = scalar_select %p54, 0, %s53
      %s56 = ssub.s32 %s37, %s51
      %s57 = ssub.s32 %s38, %s47
      %s58 = sor.u32 %s56, %s57
      %p59 = scmp.eq.s32.totalorder %s58, 0
      %s61 = sadd.s32 %s60, 1
      %s62 = scalar_select %p59, %s60, %s61
      %p65 = pneg %p59
      %p66 = scmp.eq.s32.totalorder %s29, 1
      %p67 = por %p65, %p66
      %p68 = scmp.ne.s32.totalorder %s60, %s63
      %p69 = scmp.eq.s32.totalorder %s29, 0
      %p70 = por %p68, %p69
      %p71 = scmp.ne.s32.totalorder %s60, %s63
      %p72 = scmp.eq.s32.totalorder %s34, 1
      %p73 = por %p71, %p72
      %p74 = scmp.ne.s32.totalorder %s63, %s64
      %p75 = scmp.eq.s32.totalorder %s34, 0
      %p76 = por %p74, %p75
      %p77 = scmp.ne.s32.totalorder %s63, %s64
      %p78 = scmp.eq.s32.totalorder %s35, 1
      %p79 = por %p77, %p78
      %p81 = scmp.ne.s32.totalorder %s64, %s80
      %p82 = scmp.eq.s32.totalorder %s35, 0
      %p83 = por %p81, %p82
      %s84 = sadd.s32 %s38, 1
      %s85 = smul.u32 %s84, 16
      %s86 = sadd.s32 %s47, 1
      %s87 = smul.u32 %s86, 16
      %s88 = ssub.s32 %s37, %s51
      %s89 = ssub.s32 %s85, %s87
      %s90 = sor.u32 %s88, %s89
      %p91 = scmp.eq.s32.totalorder %s90, 0
      %s93 = sadd.s32 %s92, 1
      %s94 = scalar_select %p91, %s92, %s93
      %p97 = pneg %p91
      %p98 = scmp.eq.s32.totalorder %s29, 1
      %p99 = por %p97, %p98
      %p100 = scmp.ne.s32.totalorder %s92, %s95
      %p101 = scmp.eq.s32.totalorder %s29, 0
      %p102 = por %p100, %p101
      %p103 = scmp.ne.s32.totalorder %s92, %s95
      %p104 = scmp.eq.s32.totalorder %s34, 1
      %p105 = por %p103, %p104
      %p106 = scmp.ne.s32.totalorder %s95, %s96
      %p107 = scmp.eq.s32.totalorder %s34, 0
      %p108 = por %p106, %p107
      %p109 = scmp.ne.s32.totalorder %s95, %s96
      %p110 = scmp.eq.s32.totalorder %s35, 1
      %p111 = por %p109, %p110
      %p113 = scmp.ne.s32.totalorder %s96, %s112
      %p114 = scmp.eq.s32.totalorder %s35, 0
      %p115 = por %p113, %p114
      %s116 = ssub.s32 %s37, %s51
      %s117 = ssub.s32 %s38, %s47
      %s118 = sor.u32 %s116, %s117
      %p119 = scmp.eq.s32.totalorder %s118, 0
      %s121 = sadd.s32 %s120, 1
      %s122 = scalar_select %p119, %s120, %s121
      %p125 = pneg %p119
      %p126 = scmp.eq.s32.totalorder %s29, 1
      %p127 = por %p125, %p126
      %p128 = scmp.ne.s32.totalorder %s120, %s123
      %p129 = scmp.eq.s32.totalorder %s29, 0
      %p130 = por %p128, %p129
      %p131 = scmp.ne.s32.totalorder %s120, %s123
      %p132 = scmp.eq.s32.totalorder %s34, 1
      %p133 = por %p131, %p132
      %p134 = scmp.ne.s32.totalorder %s123, %s124
      %p135 = scmp.eq.s32.totalorder %s34, 0
      %p136 = por %p134, %p135
      %p137 = scmp.ne.s32.totalorder %s123, %s124
      %p138 = scmp.eq.s32.totalorder %s35, 1
      %p139 = por %p137, %p138
      %p141 = scmp.ne.s32.totalorder %s124, %s140
      %p142 = scmp.eq.s32.totalorder %s35, 0
      %p143 = por %p141, %p142
      %s144 = sadd.s32 %s38, 1
      %s145 = smul.u32 %s144, 16
      %s146 = sadd.s32 %s47, 1
      %s147 = smul.u32 %s146, 16
      %s148 = ssub.s32 %s37, %s51
      %s149 = ssub.s32 %s145, %s147
      %s150 = sor.u32 %s148, %s149
      %p151 = scmp.eq.s32.totalorder %s150, 0
      %s153 = sadd.s32 %s152, 1
      %s154 = scalar_select %p151, %s152, %s153
      %p157 = pneg %p151
      %p158 = scmp.eq.s32.totalorder %s29, 1
      %p159 = por %p157, %p158
      %p160 = scmp.ne.s32.totalorder %s152, %s155
      %p161 = scmp.eq.s32.totalorder %s29, 0
      %p162 = por %p160, %p161
      %p163 = scmp.ne.s32.totalorder %s152, %s155
      %p164 = scmp.eq.s32.totalorder %s34, 1
      %p165 = por %p163, %p164
      %p166 = scmp.ne.s32.totalorder %s155, %s156
      %p167 = scmp.eq.s32.totalorder %s34, 0
      %p168 = por %p166, %p167
      %p169 = scmp.ne.s32.totalorder %s155, %s156
      %p170 = scmp.eq.s32.totalorder %s35, 1
      %p171 = por %p169, %p170
      %p173 = scmp.ne.s32.totalorder %s156, %s172
      %p174 = scmp.eq.s32.totalorder %s35, 0
      %p175 = por %p173, %p174
      %s176 = ssub.s32 %s37, %s51
      %s177 = ssub.s32 %s38, %s47
      %s178 = sor.u32 %s176, %s177
      %p179 = scmp.eq.s32.totalorder %s178, 0
      %s181 = sadd.s32 %s180, 1
      %s182 = scalar_select %p179, %s180, %s181
      %p185 = pneg %p179
      %p186 = scmp.eq.s32.totalorder %s29, 1
      %p187 = por %p185, %p186
      %p188 = scmp.ne.s32.totalorder %s180, %s183
      %p189 = scmp.eq.s32.totalorder %s29, 0
      %p190 = por %p188, %p189
      %p191 = scmp.ne.s32.totalorder %s180, %s183
      %p192 = scmp.eq.s32.totalorder %s34, 1
      %p193 = por %p191, %p192
      %p194 = scmp.ne.s32.totalorder %s183, %s184
      %p195 = scmp.eq.s32.totalorder %s34, 0
      %p196 = por %p194, %p195
      %p197 = scmp.ne.s32.totalorder %s183, %s184
      %p198 = scmp.eq.s32.totalorder %s35, 1
      %p199 = por %p197, %p198
      %p201 = scmp.ne.s32.totalorder %s184, %s200
      %p202 = scmp.eq.s32.totalorder %s35, 0
      %p203 = por %p201, %p202
      %s204 = sadd.s32 %s38, 1
      %s205 = smul.u32 %s204, 16
      %s206 = sadd.s32 %s47, 1
      %s207 = smul.u32 %s206, 16
      %s208 = ssub.s32 %s37, %s51
      %s209 = ssub.s32 %s205, %s207
      %s210 = sor.u32 %s208, %s209
      %p211 = scmp.eq.s32.totalorder %s210, 0
      %s213 = sadd.s32 %s212, 1
      %s214 = scalar_select %p211, %s212, %s213
      %p217 = pneg %p211
      %p218 = scmp.eq.s32.totalorder %s29, 1
      %p219 = por %p217, %p218
      %p220 = scmp.ne.s32.totalorder %s212, %s215
      %p221 = scmp.eq.s32.totalorder %s29, 0
      %p222 = por %p220, %p221
      %p223 = scmp.ne.s32.totalorder %s212, %s215
      %p224 = scmp.eq.s32.totalorder %s34, 1
      %p225 = por %p223, %p224
      %p226 = scmp.ne.s32.totalorder %s215, %s216
      %p227 = scmp.eq.s32.totalorder %s34, 0
      %p228 = por %p226, %p227
      %p229 = scmp.ne.s32.totalorder %s215, %s216
      %p230 = scmp.eq.s32.totalorder %s35, 1
      %p231 = por %p229, %p230
      %p233 = scmp.ne.s32.totalorder %s216, %s232
      %p234 = scmp.eq.s32.totalorder %s35, 0
      %p235 = por %p233, %p234
      %s236 = ssub.s32 %s36, %s55
      %p237 = scmp.eq.s32.totalorder %s236, 0
      %s239 = sadd.s32 %s238, 1
      %s240 = scalar_select %p237, %s238, %s239
      %p243 = pneg %p237
      %p244 = scmp.eq.s32.totalorder %s29, 1
      %p245 = por %p243, %p244
      %p246 = scmp.ne.s32.totalorder %s238, %s241
      %p247 = scmp.eq.s32.totalorder %s29, 0
      %p248 = por %p246, %p247
      %p249 = scmp.ne.s32.totalorder %s238, %s241
      %p250 = scmp.eq.s32.totalorder %s34, 1
      %p251 = por %p249, %p250
      %p252 = scmp.ne.s32.totalorder %s241, %s242
      %p253 = scmp.eq.s32.totalorder %s34, 0
      %p254 = por %p252, %p253
      %p255 = scmp.ne.s32.totalorder %s241, %s242
      %p256 = scmp.eq.s32.totalorder %s35, 1
      %p257 = por %p255, %p256
      %p259 = scmp.ne.s32.totalorder %s242, %s258
      %p260 = scmp.eq.s32.totalorder %s35, 0
      %p261 = por %p259, %p260
      %s262 = ssub.s32 %s36, %s55
      %p263 = scmp.eq.s32.totalorder %s262, 0
      %s265 = sadd.s32 %s264, 1
      %s266 = scalar_select %p263, %s264, %s265
      %p269 = pneg %p263
      %p270 = scmp.eq.s32.totalorder %s29, 1
      %p271 = por %p269, %p270
      %p272 = scmp.ne.s32.totalorder %s264, %s267
      %p273 = scmp.eq.s32.totalorder %s29, 0
      %p274 = por %p272, %p273
      %p275 = scmp.ne.s32.totalorder %s264, %s267
      %p276 = scmp.eq.s32.totalorder %s34, 1
      %p277 = por %p275, %p276
      %p278 = scmp.ne.s32.totalorder %s267, %s268
      %p279 = scmp.eq.s32.totalorder %s34, 0
      %p280 = por %p278, %p279
      %p281 = scmp.ne.s32.totalorder %s267, %s268
      %p282 = scmp.eq.s32.totalorder %s35, 1
      %p283 = por %p281, %p282
      %p285 = scmp.ne.s32.totalorder %s268, %s284
      %p286 = scmp.eq.s32.totalorder %s35, 0
      %p287 = por %p285, %p286
      %s288 = ssub.s32 %s37, %s51
      %s289 = ssub.s32 %s38, %s47
      %s290 = sor.u32 %s288, %s289
      %s291 = ssub.s32 %s36, %s55
      %s292 = sor.u32 %s290, %s291
      %p293 = scmp.eq.s32.totalorder %s292, 0
      %s295 = sadd.s32 %s294, 1
      %s296 = scalar_select %p293, %s294, %s295
      %p299 = pneg %p293
      %p300 = scmp.eq.s32.totalorder %s29, 1
      %p301 = por %p299, %p300
      %p302 = scmp.ne.s32.totalorder %s294, %s297
      %p303 = scmp.eq.s32.totalorder %s29, 0
      %p304 = por %p302, %p303
      %p305 = scmp.ne.s32.totalorder %s294, %s297
      %p306 = scmp.eq.s32.totalorder %s34, 1
      %p307 = por %p305, %p306
      %p308 = scmp.ne.s32.totalorder %s297, %s298
      %p309 = scmp.eq.s32.totalorder %s34, 0
      %p310 = por %p308, %p309
      %p311 = scmp.ne.s32.totalorder %s297, %s298
      %p312 = scmp.eq.s32.totalorder %s35, 1
      %p313 = por %p311, %p312
      %p315 = scmp.ne.s32.totalorder %s298, %s314
      %p316 = scmp.eq.s32.totalorder %s35, 0
      %p317 = por %p315, %p316
      %p318 = scmp.le.s32.totalorder 1, %s29
      %p319 = scmp.lt.s32.totalorder %s29, 3
      %p320 = pnand %p318, %p319
      %p321 = pneg %p320
      // Predicated region
      $region9: #{tpu_custom_call.1} parent=5 // pred_check
        _
      $region10: #{tpu_custom_call.1} parent=5 // pred_check_branch
        %323 = sbr.rel (%p320) target = $region12
      $region11: #{tpu_custom_call.1} parent=5 // pred_region
        %s324 = ssub.s32 %s29, 1
        // Predicated region
        $region13: #{tpu_custom_call.1} parent=11 // pred_check
          %p325 = pneg %p254
        $region14: #{tpu_custom_call.1} parent=11 // pred_check_branch
          %327 = sbr.rel (%p325) target = $region16
        $region15: #{tpu_custom_call.1} parent=11 // pred_region
          %s329 = ssub.s32 9216, 9216
          %330 = vsyncadd [#allocation12], %s329
          %s331 = smul.addr %s39, 64
          %s332 = scalar_lea.hbm %s6, %s331
          %s333 = sshll.u32 [#allocation13], 4
          %s334 = int_to_ptr.vmem [resolvable:$true] %s333
          %339 = dma.hbm_to_vmem [thread:$0]  %s332, 9216, %s334, [#allocation12], 64, 64, 4
        $region16: #{tpu_custom_call.1} parent=11 // pred_fallthru
          _
        // Predicated region
        $region17: #{tpu_custom_call.1} parent=11 // pred_check
          %p340 = pneg %p280
        $region18: #{tpu_custom_call.1} parent=11 // pred_check_branch
          %342 = sbr.rel (%p340) target = $region20
        $region19: #{tpu_custom_call.1} parent=11 // pred_region
          %p343 = scmp.lt.s32.totalorder %s39, 0
          %s344 = scalar_select %p343, %s39, 0
          %s345 = scalar_lea.vmem %s7, %s344
        $region20: #{tpu_custom_call.1} parent=11 // pred_fallthru
          _
      $region12: #{tpu_custom_call.1} parent=5 // pred_fallthru
        _
      %p346 = scmp.lt.s32.totalorder %s29, 2
      // Predicated region
      $region21: #{tpu_custom_call.1} parent=5 // pred_check
        %p347 = pneg %p346
      $region22: #{tpu_custom_call.1} parent=5 // pred_check_branch
        %349 = sbr.rel (%p347) target = $region24
      $region23: #{tpu_custom_call.1} parent=5 // pred_region
        // Predicated region
        $region25: #{tpu_custom_call.1} parent=23 // pred_check
          %p350 = pneg %p70
        $region26: #{tpu_custom_call.1} parent=23 // pred_check_branch
          %352 = sbr.rel (%p350) target = $region28
        $region27: #{tpu_custom_call.1} parent=23 // pred_region
          %s353 = sand.u32 %s60, 1
          %s354 = scalar_lea.sflag [#allocation3], %s353
          %s355 = sand.u32 %s60, 1
          %s356 = smul.addr %s355, 128
          %s357 = scalar_lea.vmem [#allocation2], %s356
          %s358 = smul.u32 16, %s38
          %s359 = ssub.s32 17, %s358
          %p360 = scmp.lt.s32.totalorder %s359, 16
          %s361 = scalar_select %p360, %s359, 16
          %s362 = smul.u32 64, %s361
          %s363 = smul.u32 %s362, 2
          %s365 = ssub.s32 2048, %s363
          %366 = vsyncadd %s354, %s365
          %p367 = scmp.ne.s32.totalorder 0, %s363
          %s368 = smul.addr %s358, 2
          %s369 = smul.addr %s37, 34
          %s370 = sadd.s32 %s368, %s369
          %s371 = smul.addr %s370, 64
          %s372 = scalar_lea.hbm %s0, %s371
          %s373 = smul.u32 %s361, 2
          %s374 = smul.u32 4, %s373
          %s375 = sshll.u32 %s357, 4
          %s376 = int_to_ptr.vmem [resolvable:$true] %s375
          %s377 = sshll.u32 %s374, 4
          %381 = dma.hbm_to_vmem [thread:$0]  (%p367), %s372, %s377, %s376, %s354, 64, 64, 4
        $region28: #{tpu_custom_call.1} parent=23 // pred_fallthru
          _
        // Predicated region
        $region29: #{tpu_custom_call.1} parent=23 // pred_check
          %p382 = pneg %p102
        $region30: #{tpu_custom_call.1} parent=23 // pred_check_branch
          %384 = sbr.rel (%p382) target = $region32
        $region31: #{tpu_custom_call.1} parent=23 // pred_region
          %s385 = sand.u32 %s29, 1
          %s386 = scalar_lea.sflag [#allocation6], %s385
          %s387 = sand.u32 %s92, 1
          %s388 = smul.addr %s387, 8
          %s389 = scalar_lea.vmem [#allocation5], %s388
          %s390 = sadd.s32 %s38, 1
          %s391 = smul.u32 %s390, 16
          %s393 = ssub.s32 128, 128
          %394 = vsyncadd %s386, %s393
          %s395 = smul.addr %s391, 2
          %s396 = smul.addr %s37, 34
          %s397 = sadd.s32 %s395, %s396
          %s398 = smul.addr %s397, 64
          %s399 = scalar_lea.hbm %s1, %s398
          %s400 = sshll.u32 %s389, 4
          %s401 = int_to_ptr.vmem [resolvable:$true] %s400
          %406 = dma.hbm_to_vmem [thread:$0]  %s399, 128, %s401, %s386, 64, 64, 4
        $region32: #{tpu_custom_call.1} parent=23 // pred_fallthru
          _
        // Predicated region
        $region33: #{tpu_custom_call.1} parent=23 // pred_check
          %p407 = pneg %p130
        $region34: #{tpu_custom_call.1} parent=23 // pred_check_branch
          %409 = sbr.rel (%p407) target = $region36
        $region35: #{tpu_custom_call.1} parent=23 // pred_region
          %s410 = sand.u32 %s29, 1
          %s411 = scalar_lea.sflag [#allocation6], %s410
          %s412 = sand.u32 %s120, 1
          %s413 = smul.addr %s412, 128
          %s414 = scalar_lea.vmem [#allocation7], %s413
          %s415 = smul.u32 16, %s38
          %s416 = ssub.s32 17, %s415
          %p417 = scmp.lt.s32.totalorder %s416, 16
          %s418 = scalar_select %p417, %s416, 16
          %s419 = smul.u32 64, %s418
          %s420 = smul.u32 %s419, 2
          %s422 = ssub.s32 2048, %s420
          %423 = vsyncadd %s411, %s422
          %p424 = scmp.ne.s32.totalorder 0, %s420
          %s425 = smul.addr %s415, 2
          %s426 = smul.addr %s37, 34
          %s427 = sadd.s32 %s425, %s426
          %s428 = smul.addr %s427, 64
          %s429 = scalar_lea.hbm %s2, %s428
          %s430 = smul.u32 %s418, 2
          %s431 = smul.u32 4, %s430
          %s432 = sshll.u32 %s414, 4
          %s433 = int_to_ptr.vmem [resolvable:$true] %s432
          %s434 = sshll.u32 %s431, 4
          %438 = dma.hbm_to_vmem [thread:$0]  (%p424), %s429, %s434, %s433, %s411, 64, 64, 4
        $region36: #{tpu_custom_call.1} parent=23 // pred_fallthru
          _
        // Predicated region
        $region37: #{tpu_custom_call.1} parent=23 // pred_check
          %p439 = pneg %p162
        $region38: #{tpu_custom_call.1} parent=23 // pred_check_branch
          %441 = sbr.rel (%p439) target = $region40
        $region39: #{tpu_custom_call.1} parent=23 // pred_region
          %s442 = sand.u32 %s29, 1
          %s443 = scalar_lea.sflag [#allocation9], %s442
          %s444 = sand.u32 %s152, 1
          %s445 = smul.addr %s444, 8
          %s446 = scalar_lea.vmem [#allocation8], %s445
          %s447 = sadd.s32 %s38, 1
          %s448 = smul.u32 %s447, 16
          %s450 = ssub.s32 128, 128
          %451 = vsyncadd %s443, %s450
          %s452 = smul.addr %s448, 2
          %s453 = smul.addr %s37, 34
          %s454 = sadd.s32 %s452, %s453
          %s455 = smul.addr %s454, 64
          %s456 = scalar_lea.hbm %s3, %s455
          %s457 = sshll.u32 %s446, 4
          %s458 = int_to_ptr.vmem [resolvable:$true] %s457
          %463 = dma.hbm_to_vmem [thread:$0]  %s456, 128, %s458, %s443, 64, 64, 4
        $region40: #{tpu_custom_call.1} parent=23 // pred_fallthru
          _
        // Predicated region
        $region41: #{tpu_custom_call.1} parent=23 // pred_check
          %p464 = pneg %p190
        $region42: #{tpu_custom_call.1} parent=23 // pred_check_branch
          %466 = sbr.rel (%p464) target = $region44
        $region43: #{tpu_custom_call.1} parent=23 // pred_region
          %s467 = sand.u32 %s29, 1
          %s468 = scalar_lea.sflag [#allocation9], %s467
          %s469 = sand.u32 %s180, 1
          %s470 = smul.addr %s469, 128
          %s471 = scalar_lea.vmem [#allocation10], %s470
          %s472 = smul.u32 16, %s38
          %s473 = ssub.s32 17, %s472
          %p474 = scmp.lt.s32.totalorder %s473, 16
          %s475 = scalar_select %p474, %s473, 16
          %s476 = smul.u32 64, %s475
          %s477 = smul.u32 %s476, 2
          %s479 = ssub.s32 2048, %s477
          %480 = vsyncadd %s468, %s479
          %p481 = scmp.ne.s32.totalorder 0, %s477
          %s482 = smul.addr %s472, 2
          %s483 = smul.addr %s37, 34
          %s484 = sadd.s32 %s482, %s483
          %s485 = smul.addr %s484, 64
          %s486 = scalar_lea.hbm %s4, %s485
          %s487 = smul.u32 %s475, 2
          %s488 = smul.u32 4, %s487
          %s489 = sshll.u32 %s471, 4
          %s490 = int_to_ptr.vmem [resolvable:$true] %s489
          %s491 = sshll.u32 %s488, 4
          %495 = dma.hbm_to_vmem [thread:$0]  (%p481), %s486, %s491, %s490, %s468, 64, 64, 4
        $region44: #{tpu_custom_call.1} parent=23 // pred_fallthru
          _
        // Predicated region
        $region45: #{tpu_custom_call.1} parent=23 // pred_check
          %p496 = pneg %p222
        $region46: #{tpu_custom_call.1} parent=23 // pred_check_branch
          %498 = sbr.rel (%p496) target = $region48
        $region47: #{tpu_custom_call.1} parent=23 // pred_region
          %s499 = sand.u32 %s29, 1
          %s500 = scalar_lea.sflag [#allocation12], %s499
          %s501 = sand.u32 %s212, 1
          %s502 = smul.addr %s501, 8
          %s503 = scalar_lea.vmem [#allocation11], %s502
          %s504 = sadd.s32 %s38, 1
          %s505 = smul.u32 %s504, 16
          %s507 = ssub.s32 128, 128
          %508 = vsyncadd %s500, %s507
          %s509 = smul.addr %s505, 2
          %s510 = smul.addr %s37, 34
          %s511 = sadd.s32 %s509, %s510
          %s512 = smul.addr %s511, 64
          %s513 = scalar_lea.hbm %s5, %s512
          %s514 = sshll.u32 %s503, 4
          %s515 = int_to_ptr.vmem [resolvable:$true] %s514
          %520 = dma.hbm_to_vmem [thread:$0]  %s513, 128, %s515, %s500, 64, 64, 4
        $region48: #{tpu_custom_call.1} parent=23 // pred_fallthru
          _
      $region24: #{tpu_custom_call.1} parent=5 // pred_fallthru
        _
      %p521 = scmp.le.s32.totalorder 1, %s29
      %p522 = scmp.lt.s32.totalorder %s29, 3
      %p523 = pnand %p521, %p522
      %p524 = pneg %p523
      // Predicated region
      $region49: #{tpu_custom_call.1} parent=5 // pred_check
        _
      $region50: #{tpu_custom_call.1} parent=5 // pred_check_branch
        %526 = sbr.rel (%p523) target = $region52
      $region51: #{tpu_custom_call.1} parent=5 // pred_region
        %s527 = ssub.s32 %s29, 1
        %s528 = sand.u32 %s63, 1
        %s529 = scalar_lea.sflag [#allocation3], %s528
        %s530 = sand.u32 %s63, 1
        %s531 = smul.addr %s530, 128
        %s532 = scalar_lea.vmem [#allocation2], %s531
        // Predicated region
        $region53: #{tpu_custom_call.1} parent=51 // pred_check
          %p533 = pneg %p76
        $region54: #{tpu_custom_call.1} parent=51 // pred_check_branch
          %535 = sbr.rel (%p533) target = $region56
        $region55: #{tpu_custom_call.1} parent=51 // pred_region
          %536 = dma.done %s529, 2048
        $region56: #{tpu_custom_call.1} parent=51 // pred_fallthru
          _
        %s537 = sand.u32 %s34, 1
        %s538 = scalar_lea.sflag [#allocation6], %s537
        %s539 = sand.u32 %s95, 1
        %s540 = smul.addr %s539, 8
        %s541 = scalar_lea.vmem [#allocation5], %s540
        // Predicated region
        $region57: #{tpu_custom_call.1} parent=51 // pred_check
          %p542 = pneg %p108
        $region58: #{tpu_custom_call.1} parent=51 // pred_check_branch
          %544 = sbr.rel (%p542) target = $region60
        $region59: #{tpu_custom_call.1} parent=51 // pred_region
          %545 = dma.done %s538, 128
        $region60: #{tpu_custom_call.1} parent=51 // pred_fallthru
          _
        %s546 = sand.u32 %s34, 1
        %s547 = scalar_lea.sflag [#allocation6], %s546
        %s548 = sand.u32 %s123, 1
        %s549 = smul.addr %s548, 128
        %s550 = scalar_lea.vmem [#allocation7], %s549
        // Predicated region
        $region61: #{tpu_custom_call.1} parent=51 // pred_check
          %p551 = pneg %p136
        $region62: #{tpu_custom_call.1} parent=51 // pred_check_branch
          %553 = sbr.rel (%p551) target = $region64
        $region63: #{tpu_custom_call.1} parent=51 // pred_region
          %554 = dma.done %s547, 2048
        $region64: #{tpu_custom_call.1} parent=51 // pred_fallthru
          _
        %s555 = sand.u32 %s34, 1
        %s556 = scalar_lea.sflag [#allocation9], %s555
        %s557 = sand.u32 %s155, 1
        %s558 = smul.addr %s557, 8
        %s559 = scalar_lea.vmem [#allocation8], %s558
        // Predicated region
        $region65: #{tpu_custom_call.1} parent=51 // pred_check
          %p560 = pneg %p168
        $region66: #{tpu_custom_call.1} parent=51 // pred_check_branch
          %562 = sbr.rel (%p560) target = $region68
        $region67: #{tpu_custom_call.1} parent=51 // pred_region
          %563 = dma.done %s556, 128
        $region68: #{tpu_custom_call.1} parent=51 // pred_fallthru
          _
        %s564 = sand.u32 %s34, 1
        %s565 = scalar_lea.sflag [#allocation9], %s564
        %s566 = sand.u32 %s183, 1
        %s567 = smul.addr %s566, 128
        %s568 = scalar_lea.vmem [#allocation10], %s567
        // Predicated region
        $region69: #{tpu_custom_call.1} parent=51 // pred_check
          %p569 = pneg %p196
        $region70: #{tpu_custom_call.1} parent=51 // pred_check_branch
          %571 = sbr.rel (%p569) target = $region72
        $region71: #{tpu_custom_call.1} parent=51 // pred_region
          %572 = dma.done %s565, 2048
        $region72: #{tpu_custom_call.1} parent=51 // pred_fallthru
          _
        %s573 = sand.u32 %s34, 1
        %s574 = scalar_lea.sflag [#allocation12], %s573
        %s575 = sand.u32 %s215, 1
        %s576 = smul.addr %s575, 8
        %s577 = scalar_lea.vmem [#allocation11], %s576
        // Predicated region
        $region73: #{tpu_custom_call.1} parent=51 // pred_check
          %p578 = pneg %p228
        $region74: #{tpu_custom_call.1} parent=51 // pred_check_branch
          %580 = sbr.rel (%p578) target = $region76
        $region75: #{tpu_custom_call.1} parent=51 // pred_region
          %581 = dma.done %s574, 128
        $region76: #{tpu_custom_call.1} parent=51 // pred_fallthru
          _
        // Predicated region
        $region77: #{tpu_custom_call.1} parent=51 // pred_check
          %p582 = pneg %p254
        $region78: #{tpu_custom_call.1} parent=51 // pred_check_branch
          %584 = sbr.rel (%p582) target = $region80
        $region79: #{tpu_custom_call.1} parent=51 // pred_region
          %585 = dma.done [#allocation12], 9216
        $region80: #{tpu_custom_call.1} parent=51 // pred_fallthru
          _
        %s586 = sand.u32 %s63, 1
        %s587 = scalar_lea.sflag [#allocation3], %s586
        %s588 = sand.u32 %s63, 1
        %s589 = smul.addr %s588, 128
        %s590 = scalar_lea.vmem [#allocation2], %s589
        %p591 = pneg %p76
        %p592 = pneg %p73
        %s593 = sand.u32 %s34, 1
        %s594 = scalar_lea.sflag [#allocation6], %s593
        %s595 = sand.u32 %s95, 1
        %s596 = smul.addr %s595, 8
        %s597 = scalar_lea.vmem [#allocation5], %s596
        %p598 = pneg %p108
        %p599 = pneg %p105
        %s600 = sand.u32 %s34, 1
        %s601 = scalar_lea.sflag [#allocation6], %s600
        %s602 = sand.u32 %s123, 1
        %s603 = smul.addr %s602, 128
        %s604 = scalar_lea.vmem [#allocation7], %s603
        %p605 = pneg %p136
        %p606 = pneg %p133
        %s607 = sand.u32 %s34, 1
        %s608 = scalar_lea.sflag [#allocation9], %s607
        %s609 = sand.u32 %s155, 1
        %s610 = smul.addr %s609, 8
        %s611 = scalar_lea.vmem [#allocation8], %s610
        %p612 = pneg %p168
        %p613 = pneg %p165
        %s614 = sand.u32 %s34, 1
        %s615 = scalar_lea.sflag [#allocation9], %s614
        %s616 = sand.u32 %s183, 1
        %s617 = smul.addr %s616, 128
        %s618 = scalar_lea.vmem [#allocation10], %s617
        %p619 = pneg %p196
        %p620 = pneg %p193
        %s621 = sand.u32 %s34, 1
        %s622 = scalar_lea.sflag [#allocation12], %s621
        %s623 = sand.u32 %s215, 1
        %s624 = smul.addr %s623, 8
        %s625 = scalar_lea.vmem [#allocation11], %s624
        %p626 = pneg %p228
        %p627 = pneg %p225
        %p628 = pneg %p254
        %p629 = pneg %p251
        %p630 = scmp.lt.s32.totalorder %s39, 0
        %s631 = scalar_select %p630, %s39, 0
        %s632 = scalar_lea.vmem %s7, %s631
        %p633 = pneg %p280
        %p634 = pneg %p277
        %p635 = pneg %p310
        %p636 = pneg %p307
        %s637 = sand.u32 %s297, 1
        %s638 = scalar_lea.sflag [#allocation4], %s637
        %s639 = sand.u32 %s297, 1
        %s640 = smul.addr %s639, 128
        %s641 = scalar_lea.vmem [#allocation14], %s640
        %s642 = smul.u32 16, %s41
        %s643 = ssub.s32 17, %s642
        %p644 = scmp.lt.s32.totalorder %s643, 16
        %s645 = scalar_select %p644, %s643, 16
        %s646 = smul.u32 64, %s645
        %s647 = smul.u32 %s646, 2
        %s648 = sadd.s32 %s41, 1
        %s649 = smul.u32 %s648, 16
        %s650 = smul.u32 16, %s41
        %s651 = ssub.s32 17, %s650
        %p652 = scmp.lt.s32.totalorder %s651, 16
        %s653 = scalar_select %p652, %s651, 16
        %s654 = smul.u32 64, %s653
        %s655 = smul.u32 %s654, 2
        %s656 = sadd.s32 %s41, 1
        %s657 = smul.u32 %s656, 16
        %s658 = smul.u32 16, %s41
        %s659 = ssub.s32 17, %s658
        %p660 = scmp.lt.s32.totalorder %s659, 16
        %s661 = scalar_select %p660, %s659, 16
        %s662 = smul.u32 64, %s661
        %s663 = smul.u32 %s662, 2
        %s664 = sadd.s32 %s41, 1
        %s665 = smul.u32 %s664, 16
        %p666 = scmp.lt.s32.totalorder %s39, 0
        %s667 = scalar_select %p666, %s39, 0
        %s668 = scalar_lea.vmem %s7, %s667
        %s669 = smul.u32 16, %s41
        %v671 = vld [vmem:[%s532] sm:$0xf]
        %v672 = vld [vmem:[%s532 + $0x4] sm:$0xf]
        %v673 = vld [vmem:[%s532 + $0x8] sm:$0xf]
        %v674 = vld [vmem:[%s532 + $0xc] sm:$0xf]
        %v675 = vld [vmem:[%s532 + $0x10] sm:$0xf]
        %v676 = vld [vmem:[%s532 + $0x14] sm:$0xf]
        %v677 = vld [vmem:[%s532 + $0x18] sm:$0xf]
        %v678 = vld [vmem:[%s532 + $0x1c] sm:$0xf]
        %v679 = vld [vmem:[%s532 + $0x20] sm:$0xf]
        %v680 = vld [vmem:[%s532 + $0x24] sm:$0xf]
        %v681 = vld [vmem:[%s532 + $0x28] sm:$0xf]
        %v682 = vld [vmem:[%s532 + $0x2c] sm:$0xf]
        %v683 = vld [vmem:[%s532 + $0x30] sm:$0xf]
        %v684 = vld [vmem:[%s532 + $0x34] sm:$0xf]
        %v685 = vld [vmem:[%s532 + $0x38] sm:$0xf]
        %v686 = vld [vmem:[%s532 + $0x3c] sm:$0xf]
        %v687 = vld [vmem:[%s532 + $0x40] sm:$0xf]
        %v688 = vld [vmem:[%s532 + $0x44] sm:$0xf]
        %v689 = vld [vmem:[%s532 + $0x48] sm:$0xf]
        %v690 = vld [vmem:[%s532 + $0x4c] sm:$0xf]
        %v691 = vld [vmem:[%s532 + $0x50] sm:$0xf]
        %v692 = vld [vmem:[%s532 + $0x54] sm:$0xf]
        %v693 = vld [vmem:[%s532 + $0x58] sm:$0xf]
        %v694 = vld [vmem:[%s532 + $0x5c] sm:$0xf]
        %v695 = vld [vmem:[%s532 + $0x60] sm:$0xf]
        %v696 = vld [vmem:[%s532 + $0x64] sm:$0xf]
        %v697 = vld [vmem:[%s532 + $0x68] sm:$0xf]
        %v698 = vld [vmem:[%s532 + $0x6c] sm:$0xf]
        %v699 = vld [vmem:[%s532 + $0x70] sm:$0xf]
        %v700 = vld [vmem:[%s532 + $0x74] sm:$0xf]
        %v701 = vld [vmem:[%s532 + $0x78] sm:$0xf]
        %v702 = vld [vmem:[%s532 + $0x7c] sm:$0xf]
        %v703 = vld [vmem:[%s541] sm:$0xf]
        %v704 = vld [vmem:[%s541 + $0x4] sm:$0xf]
        %v705 = vld [vmem:[#allocation13] sm:$0xf]
        %v706 = vld [vmem:[#allocation13 + $0x4] sm:$0xf]
        %v707 = vld [vmem:[#allocation13 + $0x8] sm:$0xf]
        %v708 = vld [vmem:[#allocation13 + $0xc] sm:$0xf]
        %v709 = vld [vmem:[#allocation13 + $0x10] sm:$0xf]
        %v710 = vld [vmem:[#allocation13 + $0x14] sm:$0xf]
        %v711 = vld [vmem:[#allocation13 + $0x18] sm:$0xf]
        %v712 = vld [vmem:[#allocation13 + $0x1c] sm:$0xf]
        %v713 = vld [vmem:[#allocation13 + $0x20] sm:$0xf]
        %v714 = vld [vmem:[#allocation13 + $0x24] sm:$0xf]
        %v715 = vld [vmem:[#allocation13 + $0x28] sm:$0xf]
        %v716 = vld [vmem:[#allocation13 + $0x2c] sm:$0xf]
        %v717 = vld [vmem:[#allocation13 + $0x30] sm:$0xf]
        %v718 = vld [vmem:[#allocation13 + $0x34] sm:$0xf]
        %v719 = vld [vmem:[#allocation13 + $0x38] sm:$0xf]
        %v720 = vld [vmem:[#allocation13 + $0x3c] sm:$0xf]
        %s721 = scalar_lea.vmem [#allocation13], 192
        %v722 = vld [vmem:[%s721] sm:$0xf]
        %v723 = vld [vmem:[%s721 + $0x4] sm:$0xf]
        %v724 = vld [vmem:[%s721 + $0x8] sm:$0xf]
        %v725 = vld [vmem:[%s721 + $0xc] sm:$0xf]
        %v726 = vld [vmem:[%s721 + $0x10] sm:$0xf]
        %v727 = vld [vmem:[%s721 + $0x14] sm:$0xf]
        %v728 = vld [vmem:[%s721 + $0x18] sm:$0xf]
        %v729 = vld [vmem:[%s721 + $0x1c] sm:$0xf]
        %v730 = vld [vmem:[%s721 + $0x20] sm:$0xf]
        %v731 = vld [vmem:[%s721 + $0x24] sm:$0xf]
        %v732 = vld [vmem:[%s721 + $0x28] sm:$0xf]
        %v733 = vld [vmem:[%s721 + $0x2c] sm:$0xf]
        %v734 = vld [vmem:[%s721 + $0x30] sm:$0xf]
        %v735 = vld [vmem:[%s721 + $0x34] sm:$0xf]
        %v736 = vld [vmem:[%s721 + $0x38] sm:$0xf]
        %v737 = vld [vmem:[%s721 + $0x3c] sm:$0xf]
        %v754 = vunpack.c.l.b16 %v673
        %v755 = vunpack.c.l.b16 %v674
        %v756 = vunpack.c.l.b16 %v677
        %v757 = vunpack.c.l.b16 %v678
        %v758 = vunpack.c.l.b16 %v681
        %v759 = vunpack.c.l.b16 %v682
        %v760 = vunpack.c.l.b16 %v685
        %v761 = vunpack.c.l.b16 %v686
        %v762 = vunpack.c.l.b16 %v689
        %v763 = vunpack.c.l.b16 %v690
        %v764 = vunpack.c.l.b16 %v693
        %v765 = vunpack.c.l.b16 %v694
        %v766 = vunpack.c.l.b16 %v697
        %v767 = vunpack.c.l.b16 %v698
        %v768 = vunpack.c.l.b16 %v701
        %v769 = vunpack.c.l.b16 %v702
        %v770 = vpack.c.b16 %v755, %v754
        %v771 = vpack.c.b16 %v757, %v756
        %v772 = vpack.c.b16 %v759, %v758
        %v773 = vpack.c.b16 %v761, %v760
        %v774 = vpack.c.b16 %v763, %v762
        %v775 = vpack.c.b16 %v765, %v764
        %v776 = vpack.c.b16 %v767, %v766
        %v777 = vpack.c.b16 %v769, %v768
        %v802 = vunpack.c.l.b16 %v722
        %v803 = vunpack.c.l.b16 %v723
        %v804 = vunpack.c.l.b16 %v724
        %v805 = vunpack.c.l.b16 %v725
        %v806 = vunpack.c.l.b16 %v726
        %v807 = vunpack.c.l.b16 %v727
        %v808 = vunpack.c.l.b16 %v728
        %v809 = vunpack.c.l.b16 %v729
        %v810 = vunpack.c.l.b16 %v730
        %v811 = vunpack.c.l.b16 %v731
        %v812 = vunpack.c.l.b16 %v732
        %v813 = vunpack.c.l.b16 %v733
        %v814 = vunpack.c.l.b16 %v734
        %v815 = vunpack.c.l.b16 %v735
        %v816 = vunpack.c.l.b16 %v736
        %v817 = vunpack.c.l.b16 %v737
        %v818 = vpack.c.b16 %v803, %v802
        %v819 = vpack.c.b16 %v805, %v804
        %v820 = vpack.c.b16 %v807, %v806
        %v821 = vpack.c.b16 %v809, %v808
        %v822 = vpack.c.b16 %v811, %v810
        %v823 = vpack.c.b16 %v813, %v812
        %v824 = vpack.c.b16 %v815, %v814
        %v825 = vpack.c.b16 %v817, %v816
        %834 = vmatprep.subr.bf16.mxu0 0
        %835 = vmatpush1.bf16.msra.mxu0 %v818
        %836 = vmatprep.subr.bf16.mxu0 0
        %837 = vmatpush1.bf16.msra.mxu0 %v819
        %838 = vmatprep.subr.bf16.mxu0 0
        %839 = vmatpush1.bf16.msra.mxu0 %v820
        %840 = vmatprep.subr.bf16.mxu0 0
        %841 = vmatpush1.bf16.msra.mxu0 %v821
        %842 = vmatprep.subr.bf16.mxu0 0
        %843 = vmatpush1.bf16.msra.mxu0 %v822
        %844 = vmatprep.subr.bf16.mxu0 0
        %845 = vmatpush1.bf16.msra.mxu0 %v823
        %846 = vmatprep.subr.bf16.mxu0 0
        %847 = vmatpush1.bf16.msra.mxu0 %v824
        %848 = vmatprep.subr.bf16.mxu0 0
        %849 = vmatpush1.bf16.msra.mxu0 %v825
        %850 = vmatprep.subr.bf16.mxu0 0
        %851 = vmatpush1.bf16.msra.mxu0 0
        %852 = vmatprep.subr.bf16.mxu0 0
        %853 = vmatpush1.bf16.msra.mxu0 0
        %854 = vmatprep.subr.bf16.mxu0 0
        %855 = vmatpush1.bf16.msra.mxu0 0
        %856 = vmatprep.subr.bf16.mxu0 0
        %857 = vmatpush1.bf16.msra.mxu0 0
        %858 = vmatprep.subr.bf16.mxu0 0
        %859 = vmatpush1.bf16.msra.mxu0 0
        %860 = vmatprep.subr.bf16.mxu0 0
        %861 = vmatpush1.bf16.msra.mxu0 0
        %862 = vmatprep.subr.bf16.mxu0 0
        %863 = vmatpush1.bf16.msra.mxu0 0
        %864 = vmatprep.subr.bf16.mxu0 0
        %865 = vmatpush1.bf16.msra.mxu0 0
        %866 = vmatprep.mubr.bf16.mxu0 0
        %867 = vmatmul.mubr.bf16.gmra.mrb[0].mxu0 %v770
        %v868 = vpop.f32.mrb[0].mxu0
        %v869 = vadd.f32 0.0, %v868
        %v870 = vpop.f32.mrb[0].mxu0
        %v871 = vpop.f32.mrb[0].mxu0
        %v872 = vadd.f32 0.0, %v871
        %v873 = vpop.f32.mrb[0].mxu0
        %874 = vmatprep.mubr.bf16.mxu0 0
        %875 = vmatmul.mubr.bf16.gmra.mrb[0].mxu0 %v771
        %v876 = vpop.f32.mrb[0].mxu0
        %v877 = vadd.f32 0.0, %v876
        %v878 = vpop.f32.mrb[0].mxu0
        %v879 = vpop.f32.mrb[0].mxu0
        %v880 = vadd.f32 0.0, %v879
        %v881 = vpop.f32.mrb[0].mxu0
        %882 = vmatprep.mubr.bf16.mxu0 0
        %883 = vmatmul.mubr.bf16.gmra.mrb[0].mxu0 %v772
        %v884 = vpop.f32.mrb[0].mxu0
        %v885 = vadd.f32 0.0, %v884
        %v886 = vpop.f32.mrb[0].mxu0
        %v887 = vpop.f32.mrb[0].mxu0
        %v888 = vadd.f32 0.0, %v887
        %v889 = vpop.f32.mrb[0].mxu0
        %890 = vmatprep.mubr.bf16.mxu0 0
        %891 = vmatmul.mubr.bf16.gmra.mrb[0].mxu0 %v773
        %v892 = vpop.f32.mrb[0].mxu0
        %v893 = vadd.f32 0.0, %v892
        %v894 = vpop.f32.mrb[0].mxu0
        %v895 = vpop.f32.mrb[0].mxu0
        %v896 = vadd.f32 0.0, %v895
        %v897 = vpop.f32.mrb[0].mxu0
        %898 = vmatprep.mubr.bf16.mxu0 0
        %899 = vmatmul.mubr.bf16.gmra.mrb[0].mxu0 %v774
        %v900 = vpop.f32.mrb[0].mxu0
        %v901 = vadd.f32 0.0, %v900
        %v902 = vpop.f32.mrb[0].mxu0
        %v903 = vpop.f32.mrb[0].mxu0
        %v904 = vadd.f32 0.0, %v903
        %v905 = vpop.f32.mrb[0].mxu0
        %906 = vmatprep.mubr.bf16.mxu0 0
        %907 = vmatmul.mubr.bf16.gmra.mrb[0].mxu0 %v775
        %v908 = vpop.f32.mrb[0].mxu0
        %v909 = vadd.f32 0.0, %v908
        %v910 = vpop.f32.mrb[0].mxu0
        %v911 = vpop.f32.mrb[0].mxu0
        %v912 = vadd.f32 0.0, %v911
        %v913 = vpop.f32.mrb[0].mxu0
        %914 = vmatprep.mubr.bf16.mxu0 0
        %915 = vmatmul.mubr.bf16.gmra.mrb[0].mxu0 %v776
        %v916 = vpop.f32.mrb[0].mxu0
        %v917 = vadd.f32 0.0, %v916
        %v918 = vpop.f32.mrb[0].mxu0
        %v919 = vpop.f32.mrb[0].mxu0
        %v920 = vadd.f32 0.0, %v919
        %v921 = vpop.f32.mrb[0].mxu0
        %922 = vmatprep.mubr.bf16.mxu0 0
        %923 = vmatmul.mubr.bf16.gmra.mrb[0].mxu0 %v777
        %v924 = vpop.f32.mrb[0].mxu0
        %v925 = vadd.f32 0.0, %v924
        %v926 = vpop.f32.mrb[0].mxu0
        %v927 = vpop.f32.mrb[0].mxu0
        %v928 = vadd.f32 0.0, %v927
        %v929 = vpop.f32.mrb[0].mxu0
        %930 = vdwg.mxu0
        %v947 = vunpack.c.l.b16 %v671
        %v948 = vunpack.c.l.b16 %v672
        %v949 = vunpack.c.l.b16 %v675
        %v950 = vunpack.c.l.b16 %v676
        %v951 = vunpack.c.l.b16 %v679
        %v952 = vunpack.c.l.b16 %v680
        %v953 = vunpack.c.l.b16 %v683
        %v954 = vunpack.c.l.b16 %v684
        %v955 = vunpack.c.l.b16 %v687
        %v956 = vunpack.c.l.b16 %v688
        %v957 = vunpack.c.l.b16 %v691
        %v958 = vunpack.c.l.b16 %v692
        %v959 = vunpack.c.l.b16 %v695
        %v960 = vunpack.c.l.b16 %v696
        %v961 = vunpack.c.l.b16 %v699
        %v962 = vunpack.c.l.b16 %v700
        %v963 = vpack.c.b16 %v948, %v947
        %v964 = vpack.c.b16 %v950, %v949
        %v965 = vpack.c.b16 %v952, %v951
        %v966 = vpack.c.b16 %v954, %v953
        %v967 = vpack.c.b16 %v956, %v955
        %v968 = vpack.c.b16 %v958, %v957
        %v969 = vpack.c.b16 %v960, %v959
        %v970 = vpack.c.b16 %v962, %v961
        %v995 = vunpack.c.l.b16 %v705
        %v996 = vunpack.c.l.b16 %v706
        %v997 = vunpack.c.l.b16 %v707
        %v998 = vunpack.c.l.b16 %v708
        %v999 = vunpack.c.l.b16 %v709
        %v1000 = vunpack.c.l.b16 %v710
        %v1001 = vunpack.c.l.b16 %v711
        %v1002 = vunpack.c.l.b16 %v712
        %v1003 = vunpack.c.l.b16 %v713
        %v1004 = vunpack.c.l.b16 %v714
        %v1005 = vunpack.c.l.b16 %v715
        %v1006 = vunpack.c.l.b16 %v716
        %v1007 = vunpack.c.l.b16 %v717
        %v1008 = vunpack.c.l.b16 %v718
        %v1009 = vunpack.c.l.b16 %v719
        %v1010 = vunpack.c.l.b16 %v720
        %v1011 = vpack.c.b16 %v996, %v995
        %v1012 = vpack.c.b16 %v998, %v997
        %v1013 = vpack.c.b16 %v1000, %v999
        %v1014 = vpack.c.b16 %v1002, %v1001
        %v1015 = vpack.c.b16 %v1004, %v1003
        %v1016 = vpack.c.b16 %v1006, %v1005
        %v1017 = vpack.c.b16 %v1008, %v1007
        %v1018 = vpack.c.b16 %v1010, %v1009
        %1027 = vmatprep.subr.bf16.mxu0 0
        %1028 = vmatpush1.bf16.msra.mxu0 %v1011
        %1029 = vmatprep.subr.bf16.mxu0 0
        %1030 = vmatpush1.bf16.msra.mxu0 %v1012
        %1031 = vmatprep.subr.bf16.mxu0 0
        %1032 = vmatpush1.bf16.msra.mxu0 %v1013
        %1033 = vmatprep.subr.bf16.mxu0 0
        %1034 = vmatpush1.bf16.msra.mxu0 %v1014
        %1035 = vmatprep.subr.bf16.mxu0 0
        %1036 = vmatpush1.bf16.msra.mxu0 %v1015
        %1037 = vmatprep.subr.bf16.mxu0 0
        %1038 = vmatpush1.bf16.msra.mxu0 %v1016
        %1039 = vmatprep.subr.bf16.mxu0 0
        %1040 = vmatpush1.bf16.msra.mxu0 %v1017
        %1041 = vmatprep.subr.bf16.mxu0 0
        %1042 = vmatpush1.bf16.msra.mxu0 %v1018
        %1043 = vmatprep.subr.bf16.mxu0 0
        %1044 = vmatpush1.bf16.msra.mxu0 0
        %1045 = vmatprep.subr.bf16.mxu0 0
        %1046 = vmatpush1.bf16.msra.mxu0 0
        %1047 = vmatprep.subr.bf16.mxu0 0
        %1048 = vmatpush1.bf16.msra.mxu0 0
        %1049 = vmatprep.subr.bf16.mxu0 0
        %1050 = vmatpush1.bf16.msra.mxu0 0
        %1051 = vmatprep.subr.bf16.mxu0 0
        %1052 = vmatpush1.bf16.msra.mxu0 0
        %1053 = vmatprep.subr.bf16.mxu0 0
        %1054 = vmatpush1.bf16.msra.mxu0 0
        %1055 = vmatprep.subr.bf16.mxu0 0
        %1056 = vmatpush1.bf16.msra.mxu0 0
        %1057 = vmatprep.subr.bf16.mxu0 0
        %1058 = vmatpush1.bf16.msra.mxu0 0
        %1059 = vmatprep.mubr.bf16.mxu0 0
        %1060 = vmatmul.mubr.bf16.gmra.mrb[0].mxu0 %v963
        %v1061 = vpop.f32.mrb[0].mxu0
        %v1062 = vadd.f32 %v869, %v1061
        %v1063 = vpop.f32.mrb[0].mxu0
        %v1064 = vpop.f32.mrb[0].mxu0
        %v1065 = vadd.f32 %v872, %v1064
        %v1066 = vpop.f32.mrb[0].mxu0
        %1067 = vmatprep.mubr.bf16.mxu0 0
        %1068 = vmatmul.mubr.bf16.gmra.mrb[0].mxu0 %v964
        %v1069 = vpop.f32.mrb[0].mxu0
        %v1070 = vadd.f32 %v877, %v1069
        %v1071 = vpop.f32.mrb[0].mxu0
        %v1072 = vpop.f32.mrb[0].mxu0
        %v1073 = vadd.f32 %v880, %v1072
        %v1074 = vpop.f32.mrb[0].mxu0
        %1075 = vmatprep.mubr.bf16.mxu0 0
        %1076 = vmatmul.mubr.bf16.gmra.mrb[0].mxu0 %v965
        %v1077 = vpop.f32.mrb[0].mxu0
        %v1078 = vadd.f32 %v885, %v1077
        %v1079 = vpop.f32.mrb[0].mxu0
        %v1080 = vpop.f32.mrb[0].mxu0
        %v1081 = vadd.f32 %v888, %v1080
        %v1082 = vpop.f32.mrb[0].mxu0
        %1083 = vmatprep.mubr.bf16.mxu0 0
        %1084 = vmatmul.mubr.bf16.gmra.mrb[0].mxu0 %v966
        %v1085 = vpop.f32.mrb[0].mxu0
        %v1086 = vadd.f32 %v893, %v1085
        %v1087 = vpop.f32.mrb[0].mxu0
        %v1088 = vpop.f32.mrb[0].mxu0
        %v1089 = vadd.f32 %v896, %v1088
        %v1090 = vpop.f32.mrb[0].mxu0
        %1091 = vmatprep.mubr.bf16.mxu0 0
        %1092 = vmatmul.mubr.bf16.gmra.mrb[0].mxu0 %v967
        %v1093 = vpop.f32.mrb[0].mxu0
        %v1094 = vadd.f32 %v901, %v1093
        %v1095 = vpop.f32.mrb[0].mxu0
        %v1096 = vpop.f32.mrb[0].mxu0
        %v1097 = vadd.f32 %v904, %v1096
        %v1098 = vpop.f32.mrb[0].mxu0
        %1099 = vmatprep.mubr.bf16.mxu0 0
        %1100 = vmatmul.mubr.bf16.gmra.mrb[0].mxu0 %v968
        %v1101 = vpop.f32.mrb[0].mxu0
        %v1102 = vadd.f32 %v909, %v1101
        %v1103 = vpop.f32.mrb[0].mxu0
        %v1104 = vpop.f32.mrb[0].mxu0
        %v1105 = vadd.f32 %v912, %v1104
        %v1106 = vpop.f32.mrb[0].mxu0
        %1107 = vmatprep.mubr.bf16.mxu0 0
        %1108 = vmatmul.mubr.bf16.gmra.mrb[0].mxu0 %v969
        %v1109 = vpop.f32.mrb[0].mxu0
        %v1110 = vadd.f32 %v917, %v1109
        %v1111 = vpop.f32.mrb[0].mxu0
        %v1112 = vpop.f32.mrb[0].mxu0
        %v1113 = vadd.f32 %v920, %v1112
        %v1114 = vpop.f32.mrb[0].mxu0
        %1115 = vmatprep.mubr.bf16.mxu0 0
        %1116 = vmatmul.mubr.bf16.gmra.mrb[0].mxu0 %v970
        %v1117 = vpop.f32.mrb[0].mxu0
        %v1118 = vadd.f32 %v925, %v1117
        %v1119 = vpop.f32.mrb[0].mxu0
        %v1120 = vpop.f32.mrb[0].mxu0
        %v1121 = vadd.f32 %v928, %v1120
        %v1122 = vpop.f32.mrb[0].mxu0
        %1123 = vdwg.mxu0
        %s1124 = scalar_lea.vmem [#allocation13], 384
        %v1125 = vld [vmem:[%s1124] sm:$0xf]
        %v1126 = vld [vmem:[%s1124 + $0x4] sm:$0xf]
        %v1127 = vld [vmem:[%s1124 + $0x8] sm:$0xf]
        %v1128 = vld [vmem:[%s1124 + $0xc] sm:$0xf]
        %v1129 = vld [vmem:[%s1124 + $0x10] sm:$0xf]
        %v1130 = vld [vmem:[%s1124 + $0x14] sm:$0xf]
        %v1131 = vld [vmem:[%s1124 + $0x18] sm:$0xf]
        %v1132 = vld [vmem:[%s1124 + $0x1c] sm:$0xf]
        %v1133 = vld [vmem:[%s1124 + $0x20] sm:$0xf]
        %v1134 = vld [vmem:[%s1124 + $0x24] sm:$0xf]
        %v1135 = vld [vmem:[%s1124 + $0x28] sm:$0xf]
        %v1136 = vld [vmem:[%s1124 + $0x2c] sm:$0xf]
        %v1137 = vld [vmem:[%s1124 + $0x30] sm:$0xf]
        %v1138 = vld [vmem:[%s1124 + $0x34] sm:$0xf]
        %v1139 = vld [vmem:[%s1124 + $0x38] sm:$0xf]
        %v1140 = vld [vmem:[%s1124 + $0x3c] sm:$0xf]
        %v1143 = vunpack.c.l.b16 %v703
        %v1144 = vunpack.c.l.b16 %v704
        %v1145 = vpack.c.b16 %v1144, %v1143
        %v1163 = vunpack.c.l.b16 %v1125
        %v1164 = vunpack.c.l.b16 %v1126
        %v1165 = vunpack.c.l.b16 %v1127
        %v1166 = vunpack.c.l.b16 %v1128
        %v1167 = vunpack.c.l.b16 %v1129
        %v1168 = vunpack.c.l.b16 %v1130
        %v1169 = vunpack.c.l.b16 %v1131
        %v1170 = vunpack.c.l.b16 %v1132
        %v1171 = vunpack.c.l.b16 %v1133
        %v1172 = vunpack.c.l.b16 %v1134
        %v1173 = vunpack.c.l.b16 %v1135
        %v1174 = vunpack.c.l.b16 %v1136
        %v1175 = vunpack.c.l.b16 %v1137
        %v1176 = vunpack.c.l.b16 %v1138
        %v1177 = vunpack.c.l.b16 %v1139
        %v1178 = vunpack.c.l.b16 %v1140
        %v1179 = vpack.c.b16 %v1164, %v1163
        %v1180 = vpack.c.b16 %v1166, %v1165
        %v1181 = vpack.c.b16 %v1168, %v1167
        %v1182 = vpack.c.b16 %v1170, %v1169
        %v1183 = vpack.c.b16 %v1172, %v1171
        %v1184 = vpack.c.b16 %v1174, %v1173
        %v1185 = vpack.c.b16 %v1176, %v1175
        %v1186 = vpack.c.b16 %v1178, %v1177
        %1195 = vmatprep.subr.bf16.mxu0 0
        %1196 = vmatpush1.bf16.msra.mxu0 %v1179
        %1197 = vmatprep.subr.bf16.mxu0 0
        %1198 = vmatpush1.bf16.msra.mxu0 %v1180
        %1199 = vmatprep.subr.bf16.mxu0 0
        %1200 = vmatpush1.bf16.msra.mxu0 %v1181
        %1201 = vmatprep.subr.bf16.mxu0 0
        %1202 = vmatpush1.bf16.msra.mxu0 %v1182
        %1203 = vmatprep.subr.bf16.mxu0 0
        %1204 = vmatpush1.bf16.msra.mxu0 %v1183
        %1205 = vmatprep.subr.bf16.mxu0 0
        %1206 = vmatpush1.bf16.msra.mxu0 %v1184
        %1207 = vmatprep.subr.bf16.mxu0 0
        %1208 = vmatpush1.bf16.msra.mxu0 %v1185
        %1209 = vmatprep.subr.bf16.mxu0 0
        %1210 = vmatpush1.bf16.msra.mxu0 %v1186
        %1211 = vmatprep.subr.bf16.mxu0 0
        %1212 = vmatpush1.bf16.msra.mxu0 0
        %1213 = vmatprep.subr.bf16.mxu0 0
        %1214 = vmatpush1.bf16.msra.mxu0 0
        %1215 = vmatprep.subr.bf16.mxu0 0
        %1216 = vmatpush1.bf16.msra.mxu0 0
        %1217 = vmatprep.subr.bf16.mxu0 0
        %1218 = vmatpush1.bf16.msra.mxu0 0
        %1219 = vmatprep.subr.bf16.mxu0 0
        %1220 = vmatpush1.bf16.msra.mxu0 0
        %1221 = vmatprep.subr.bf16.mxu0 0
        %1222 = vmatpush1.bf16.msra.mxu0 0
        %1223 = vmatprep.subr.bf16.mxu0 0
        %1224 = vmatpush1.bf16.msra.mxu0 0
        %1225 = vmatprep.subr.bf16.mxu0 0
        %1226 = vmatpush1.bf16.msra.mxu0 0
        %1227 = vmatprep.mubr.bf16.mxu0 0
        %1228 = vmatmul.mubr.bf16.gmra.mrb[0].mxu0 %v964
        %v1229 = vpop.f32.mrb[0].mxu0
        %v1230 = vadd.f32 0.0, %v1229
        %v1231 = vpop.f32.mrb[0].mxu0
        %v1232 = vpop.f32.mrb[0].mxu0
        %v1233 = vadd.f32 0.0, %v1232
        %v1234 = vpop.f32.mrb[0].mxu0
        %1235 = vmatprep.mubr.bf16.mxu0 0
        %1236 = vmatmul.mubr.bf16.gmra.mrb[0].mxu0 %v965
        %v1237 = vpop.f32.mrb[0].mxu0
        %v1238 = vadd.f32 0.0, %v1237
        %v1239 = vpop.f32.mrb[0].mxu0
        %v1240 = vpop.f32.mrb[0].mxu0
        %v1241 = vadd.f32 0.0, %v1240
        %v1242 = vpop.f32.mrb[0].mxu0
        %1243 = vmatprep.mubr.bf16.mxu0 0
        %1244 = vmatmul.mubr.bf16.gmra.mrb[0].mxu0 %v966
        %v1245 = vpop.f32.mrb[0].mxu0
        %v1246 = vadd.f32 0.0, %v1245
        %v1247 = vpop.f32.mrb[0].mxu0
        %v1248 = vpop.f32.mrb[0].mxu0
        %v1249 = vadd.f32 0.0, %v1248
        %v1250 = vpop.f32.mrb[0].mxu0
        %1251 = vmatprep.mubr.bf16.mxu0 0
        %1252 = vmatmul.mubr.bf16.gmra.mrb[0].mxu0 %v967
        %v1253 = vpop.f32.mrb[0].mxu0
        %v1254 = vadd.f32 0.0, %v1253
        %v1255 = vpop.f32.mrb[0].mxu0
        %v1256 = vpop.f32.mrb[0].mxu0
        %v1257 = vadd.f32 0.0, %v1256
        %v1258 = vpop.f32.mrb[0].mxu0
        %1259 = vmatprep.mubr.bf16.mxu0 0
        %1260 = vmatmul.mubr.bf16.gmra.mrb[0].mxu0 %v968
        %v1261 = vpop.f32.mrb[0].mxu0
        %v1262 = vadd.f32 0.0, %v1261
        %v1263 = vpop.f32.mrb[0].mxu0
        %v1264 = vpop.f32.mrb[0].mxu0
        %v1265 = vadd.f32 0.0, %v1264
        %v1266 = vpop.f32.mrb[0].mxu0
        %1267 = vmatprep.mubr.bf16.mxu0 0
        %1268 = vmatmul.mubr.bf16.gmra.mrb[0].mxu0 %v969
        %v1269 = vpop.f32.mrb[0].mxu0
        %v1270 = vadd.f32 0.0, %v1269
        %v1271 = vpop.f32.mrb[0].mxu0
        %v1272 = vpop.f32.mrb[0].mxu0
        %v1273 = vadd.f32 0.0, %v1272
        %v1274 = vpop.f32.mrb[0].mxu0
        %1275 = vmatprep.mubr.bf16.mxu0 0
        %1276 = vmatmul.mubr.bf16.gmra.mrb[0].mxu0 %v970
        %v1277 = vpop.f32.mrb[0].mxu0
        %v1278 = vadd.f32 0.0, %v1277
        %v1279 = vpop.f32.mrb[0].mxu0
        %v1280 = vpop.f32.mrb[0].mxu0
        %v1281 = vadd.f32 0.0, %v1280
        %v1282 = vpop.f32.mrb[0].mxu0
        %1283 = vmatprep.mubr.bf16.mxu0 0
        %1284 = vmatmul.mubr.bf16.gmra.mrb[0].mxu0 %v1145
        %v1285 = vpop.f32.mrb[0].mxu0
        %v1286 = vadd.f32 0.0, %v1285
        %v1287 = vpop.f32.mrb[0].mxu0
        %v1288 = vpop.f32.mrb[0].mxu0
        %v1289 = vadd.f32 0.0, %v1288
        %v1290 = vpop.f32.mrb[0].mxu0
        %1291 = vdwg.mxu0
        %v1292 = vadd.f32 %v1062, %v1230
        %v1293 = vadd.f32 %v1065, %v1233
        %v1294 = vadd.f32 %v1070, %v1238
        %v1295 = vadd.f32 %v1073, %v1241
        %v1296 = vadd.f32 %v1078, %v1246
        %v1297 = vadd.f32 %v1081, %v1249
        %v1298 = vadd.f32 %v1086, %v1254
        %v1299 = vadd.f32 %v1089, %v1257
        %v1300 = vadd.f32 %v1094, %v1262
        %v1301 = vadd.f32 %v1097, %v1265
        %v1302 = vadd.f32 %v1102, %v1270
        %v1303 = vadd.f32 %v1105, %v1273
        %v1304 = vadd.f32 %v1110, %v1278
        %v1305 = vadd.f32 %v1113, %v1281
        %v1306 = vadd.f32 %v1118, %v1286
        %v1307 = vadd.f32 %v1121, %v1289
        %v1308 = vld [vmem:[%s550] sm:$0xf]
        %v1309 = vld [vmem:[%s550 + $0x4] sm:$0xf]
        %v1310 = vld [vmem:[%s550 + $0x8] sm:$0xf]
        %v1311 = vld [vmem:[%s550 + $0xc] sm:$0xf]
        %v1312 = vld [vmem:[%s550 + $0x10] sm:$0xf]
        %v1313 = vld [vmem:[%s550 + $0x14] sm:$0xf]
        %v1314 = vld [vmem:[%s550 + $0x18] sm:$0xf]
        %v1315 = vld [vmem:[%s550 + $0x1c] sm:$0xf]
        %v1316 = vld [vmem:[%s550 + $0x20] sm:$0xf]
        %v1317 = vld [vmem:[%s550 + $0x24] sm:$0xf]
        %v1318 = vld [vmem:[%s550 + $0x28] sm:$0xf]
        %v1319 = vld [vmem:[%s550 + $0x2c] sm:$0xf]
        %v1320 = vld [vmem:[%s550 + $0x30] sm:$0xf]
        %v1321 = vld [vmem:[%s550 + $0x34] sm:$0xf]
        %v1322 = vld [vmem:[%s550 + $0x38] sm:$0xf]
        %v1323 = vld [vmem:[%s550 + $0x3c] sm:$0xf]
        %v1324 = vld [vmem:[%s550 + $0x40] sm:$0xf]
        %v1325 = vld [vmem:[%s550 + $0x44] sm:$0xf]
        %v1326 = vld [vmem:[%s550 + $0x48] sm:$0xf]
        %v1327 = vld [vmem:[%s550 + $0x4c] sm:$0xf]
        %v1328 = vld [vmem:[%s550 + $0x50] sm:$0xf]
        %v1329 = vld [vmem:[%s550 + $0x54] sm:$0xf]
        %v1330 = vld [vmem:[%s550 + $0x58] sm:$0xf]
        %v1331 = vld [vmem:[%s550 + $0x5c] sm:$0xf]
        %v1332 = vld [vmem:[%s550 + $0x60] sm:$0xf]
        %v1333 = vld [vmem:[%s550 + $0x64] sm:$0xf]
        %v1334 = vld [vmem:[%s550 + $0x68] sm:$0xf]
        %v1335 = vld [vmem:[%s550 + $0x6c] sm:$0xf]
        %v1336 = vld [vmem:[%s550 + $0x70] sm:$0xf]
        %v1337 = vld [vmem:[%s550 + $0x74] sm:$0xf]
        %v1338 = vld [vmem:[%s550 + $0x78] sm:$0xf]
        %v1339 = vld [vmem:[%s550 + $0x7c] sm:$0xf]
        %v1340 = vld [vmem:[%s559] sm:$0xf]
        %v1341 = vld [vmem:[%s559 + $0x4] sm:$0xf]
        %s1342 = scalar_lea.vmem [#allocation13], 64
        %v1343 = vld [vmem:[%s1342] sm:$0xf]
        %v1344 = vld [vmem:[%s1342 + $0x4] sm:$0xf]
        %v1345 = vld [vmem:[%s1342 + $0x8] sm:$0xf]
        %v1346 = vld [vmem:[%s1342 + $0xc] sm:$0xf]
        %v1347 = vld [vmem:[%s1342 + $0x10] sm:$0xf]
        %v1348 = vld [vmem:[%s1342 + $0x14] sm:$0xf]
        %v1349 = vld [vmem:[%s1342 + $0x18] sm:$0xf]
        %v1350 = vld [vmem:[%s1342 + $0x1c] sm:$0xf]
        %v1351 = vld [vmem:[%s1342 + $0x20] sm:$0xf]
        %v1352 = vld [vmem:[%s1342 + $0x24] sm:$0xf]
        %v1353 = vld [vmem:[%s1342 + $0x28] sm:$0xf]
        %v1354 = vld [vmem:[%s1342 + $0x2c] sm:$0xf]
        %v1355 = vld [vmem:[%s1342 + $0x30] sm:$0xf]
        %v1356 = vld [vmem:[%s1342 + $0x34] sm:$0xf]
        %v1357 = vld [vmem:[%s1342 + $0x38] sm:$0xf]
        %v1358 = vld [vmem:[%s1342 + $0x3c] sm:$0xf]
        %v1375 = vunpack.c.l.b16 %v1308
        %v1376 = vunpack.c.l.b16 %v1309
        %v1377 = vunpack.c.l.b16 %v1312
        %v1378 = vunpack.c.l.b16 %v1313
        %v1379 = vunpack.c.l.b16 %v1316
        %v1380 = vunpack.c.l.b16 %v1317
        %v1381 = vunpack.c.l.b16 %v1320
        %v1382 = vunpack.c.l.b16 %v1321
        %v1383 = vunpack.c.l.b16 %v1324
        %v1384 = vunpack.c.l.b16 %v1325
        %v1385 = vunpack.c.l.b16 %v1328
        %v1386 = vunpack.c.l.b16 %v1329
        %v1387 = vunpack.c.l.b16 %v1332
        %v1388 = vunpack.c.l.b16 %v1333
        %v1389 = vunpack.c.l.b16 %v1336
        %v1390 = vunpack.c.l.b16 %v1337
        %v1391 = vpack.c.b16 %v1376, %v1375
        %v1392 = vpack.c.b16 %v1378, %v1377
        %v1393 = vpack.c.b16 %v1380, %v1379
        %v1394 = vpack.c.b16 %v1382, %v1381
        %v1395 = vpack.c.b16 %v1384, %v1383
        %v1396 = vpack.c.b16 %v1386, %v1385
        %v1397 = vpack.c.b16 %v1388, %v1387
        %v1398 = vpack.c.b16 %v1390, %v1389
        %v1423 = vunpack.c.l.b16 %v1343
        %v1424 = vunpack.c.l.b16 %v1344
        %v1425 = vunpack.c.l.b16 %v1345
        %v1426 = vunpack.c.l.b16 %v1346
        %v1427 = vunpack.c.l.b16 %v1347
        %v1428 = vunpack.c.l.b16 %v1348
        %v1429 = vunpack.c.l.b16 %v1349
        %v1430 = vunpack.c.l.b16 %v1350
        %v1431 = vunpack.c.l.b16 %v1351
        %v1432 = vunpack.c.l.b16 %v1352
        %v1433 = vunpack.c.l.b16 %v1353
        %v1434 = vunpack.c.l.b16 %v1354
        %v1435 = vunpack.c.l.b16 %v1355
        %v1436 = vunpack.c.l.b16 %v1356
        %v1437 = vunpack.c.l.b16 %v1357
        %v1438 = vunpack.c.l.b16 %v1358
        %v1439 = vpack.c.b16 %v1424, %v1423
        %v1440 = vpack.c.b16 %v1426, %v1425
        %v1441 = vpack.c.b16 %v1428, %v1427
        %v1442 = vpack.c.b16 %v1430, %v1429
        %v1443 = vpack.c.b16 %v1432, %v1431
        %v1444 = vpack.c.b16 %v1434, %v1433
        %v1445 = vpack.c.b16 %v1436, %v1435
        %v1446 = vpack.c.b16 %v1438, %v1437
        %1455 = vmatprep.subr.bf16.mxu0 0
        %1456 = vmatpush1.bf16.msra.mxu0 %v1439
        %1457 = vmatprep.subr.bf16.mxu0 0
        %1458 = vmatpush1.bf16.msra.mxu0 %v1440
        %1459 = vmatprep.subr.bf16.mxu0 0
        %1460 = vmatpush1.bf16.msra.mxu0 %v1441
        %1461 = vmatprep.subr.bf16.mxu0 0
        %1462 = vmatpush1.bf16.msra.mxu0 %v1442
        %1463 = vmatprep.subr.bf16.mxu0 0
        %1464 = vmatpush1.bf16.msra.mxu0 %v1443
        %1465 = vmatprep.subr.bf16.mxu0 0
        %1466 = vmatpush1.bf16.msra.mxu0 %v1444
        %1467 = vmatprep.subr.bf16.mxu0 0
        %1468 = vmatpush1.bf16.msra.mxu0 %v1445
        %1469 = vmatprep.subr.bf16.mxu0 0
        %1470 = vmatpush1.bf16.msra.mxu0 %v1446
        %1471 = vmatprep.subr.bf16.mxu0 0
        %1472 = vmatpush1.bf16.msra.mxu0 0
        %1473 = vmatprep.subr.bf16.mxu0 0
        %1474 = vmatpush1.bf16.msra.mxu0 0
        %1475 = vmatprep.subr.bf16.mxu0 0
        %1476 = vmatpush1.bf16.msra.mxu0 0
        %1477 = vmatprep.subr.bf16.mxu0 0
        %1478 = vmatpush1.bf16.msra.mxu0 0
        %1479 = vmatprep.subr.bf16.mxu0 0
        %1480 = vmatpush1.bf16.msra.mxu0 0
        %1481 = vmatprep.subr.bf16.mxu0 0
        %1482 = vmatpush1.bf16.msra.mxu0 0
        %1483 = vmatprep.subr.bf16.mxu0 0
        %1484 = vmatpush1.bf16.msra.mxu0 0
        %1485 = vmatprep.subr.bf16.mxu0 0
        %1486 = vmatpush1.bf16.msra.mxu0 0
        %1487 = vmatprep.mubr.bf16.mxu0 0
        %1488 = vmatmul.mubr.bf16.gmra.mrb[0].mxu0 %v1391
        %v1489 = vpop.f32.mrb[0].mxu0
        %v1490 = vadd.f32 0.0, %v1489
        %v1491 = vpop.f32.mrb[0].mxu0
        %v1492 = vpop.f32.mrb[0].mxu0
        %v1493 = vadd.f32 0.0, %v1492
        %v1494 = vpop.f32.mrb[0].mxu0
        %1495 = vmatprep.mubr.bf16.mxu0 0
        %1496 = vmatmul.mubr.bf16.gmra.mrb[0].mxu0 %v1392
        %v1497 = vpop.f32.mrb[0].mxu0
        %v1498 = vadd.f32 0.0, %v1497
        %v1499 = vpop.f32.mrb[0].mxu0
        %v1500 = vpop.f32.mrb[0].mxu0
        %v1501 = vadd.f32 0.0, %v1500
        %v1502 = vpop.f32.mrb[0].mxu0
        %1503 = vmatprep.mubr.bf16.mxu0 0
        %1504 = vmatmul.mubr.bf16.gmra.mrb[0].mxu0 %v1393
        %v1505 = vpop.f32.mrb[0].mxu0
        %v1506 = vadd.f32 0.0, %v1505
        %v1507 = vpop.f32.mrb[0].mxu0
        %v1508 = vpop.f32.mrb[0].mxu0
        %v1509 = vadd.f32 0.0, %v1508
        %v1510 = vpop.f32.mrb[0].mxu0
        %1511 = vmatprep.mubr.bf16.mxu0 0
        %1512 = vmatmul.mubr.bf16.gmra.mrb[0].mxu0 %v1394
        %v1513 = vpop.f32.mrb[0].mxu0
        %v1514 = vadd.f32 0.0, %v1513
        %v1515 = vpop.f32.mrb[0].mxu0
        %v1516 = vpop.f32.mrb[0].mxu0
        %v1517 = vadd.f32 0.0, %v1516
        %v1518 = vpop.f32.mrb[0].mxu0
        %1519 = vmatprep.mubr.bf16.mxu0 0
        %1520 = vmatmul.mubr.bf16.gmra.mrb[0].mxu0 %v1395
        %v1521 = vpop.f32.mrb[0].mxu0
        %v1522 = vadd.f32 0.0, %v1521
        %v1523 = vpop.f32.mrb[0].mxu0
        %v1524 = vpop.f32.mrb[0].mxu0
        %v1525 = vadd.f32 0.0, %v1524
        %v1526 = vpop.f32.mrb[0].mxu0
        %1527 = vmatprep.mubr.bf16.mxu0 0
        %1528 = vmatmul.mubr.bf16.gmra.mrb[0].mxu0 %v1396
        %v1529 = vpop.f32.mrb[0].mxu0
        %v1530 = vadd.f32 0.0, %v1529
        %v1531 = vpop.f32.mrb[0].mxu0
        %v1532 = vpop.f32.mrb[0].mxu0
        %v1533 = vadd.f32 0.0, %v1532
        %v1534 = vpop.f32.mrb[0].mxu0
        %1535 = vmatprep.mubr.bf16.mxu0 0
        %1536 = vmatmul.mubr.bf16.gmra.mrb[0].mxu0 %v1397
        %v1537 = vpop.f32.mrb[0].mxu0
        %v1538 = vadd.f32 0.0, %v1537
        %v1539 = vpop.f32.mrb[0].mxu0
        %v1540 = vpop.f32.mrb[0].mxu0
        %v1541 = vadd.f32 0.0, %v1540
        %v1542 = vpop.f32.mrb[0].mxu0
        %1543 = vmatprep.mubr.bf16.mxu0 0
        %1544 = vmatmul.mubr.bf16.gmra.mrb[0].mxu0 %v1398
        %v1545 = vpop.f32.mrb[0].mxu0
        %v1546 = vadd.f32 0.0, %v1545
        %v1547 = vpop.f32.mrb[0].mxu0
        %v1548 = vpop.f32.mrb[0].mxu0
        %v1549 = vadd.f32 0.0, %v1548
        %v1550 = vpop.f32.mrb[0].mxu0
        %1551 = vdwg.mxu0
        %v1552 = vadd.f32 %v1292, %v1490
        %v1553 = vadd.f32 %v1293, %v1493
        %v1554 = vadd.f32 %v1294, %v1498
        %v1555 = vadd.f32 %v1295, %v1501
        %v1556 = vadd.f32 %v1296, %v1506
        %v1557 = vadd.f32 %v1297, %v1509
        %v1558 = vadd.f32 %v1298, %v1514
        %v1559 = vadd.f32 %v1299, %v1517
        %v1560 = vadd.f32 %v1300, %v1522
        %v1561 = vadd.f32 %v1301, %v1525
        %v1562 = vadd.f32 %v1302, %v1530
        %v1563 = vadd.f32 %v1303, %v1533
        %v1564 = vadd.f32 %v1304, %v1538
        %v1565 = vadd.f32 %v1305, %v1541
        %v1566 = vadd.f32 %v1306, %v1546
        %v1567 = vadd.f32 %v1307, %v1549
        %s1568 = scalar_lea.vmem [#allocation13], 256
        %v1569 = vld [vmem:[%s1568] sm:$0xf]
        %v1570 = vld [vmem:[%s1568 + $0x4] sm:$0xf]
        %v1571 = vld [vmem:[%s1568 + $0x8] sm:$0xf]
        %v1572 = vld [vmem:[%s1568 + $0xc] sm:$0xf]
        %v1573 = vld [vmem:[%s1568 + $0x10] sm:$0xf]
        %v1574 = vld [vmem:[%s1568 + $0x14] sm:$0xf]
        %v1575 = vld [vmem:[%s1568 + $0x18] sm:$0xf]
        %v1576 = vld [vmem:[%s1568 + $0x1c] sm:$0xf]
        %v1577 = vld [vmem:[%s1568 + $0x20] sm:$0xf]
        %v1578 = vld [vmem:[%s1568 + $0x24] sm:$0xf]
        %v1579 = vld [vmem:[%s1568 + $0x28] sm:$0xf]
        %v1580 = vld [vmem:[%s1568 + $0x2c] sm:$0xf]
        %v1581 = vld [vmem:[%s1568 + $0x30] sm:$0xf]
        %v1582 = vld [vmem:[%s1568 + $0x34] sm:$0xf]
        %v1583 = vld [vmem:[%s1568 + $0x38] sm:$0xf]
        %v1584 = vld [vmem:[%s1568 + $0x3c] sm:$0xf]
        %v1601 = vunpack.c.l.b16 %v1310
        %v1602 = vunpack.c.l.b16 %v1311
        %v1603 = vunpack.c.l.b16 %v1314
        %v1604 = vunpack.c.l.b16 %v1315
        %v1605 = vunpack.c.l.b16 %v1318
        %v1606 = vunpack.c.l.b16 %v1319
        %v1607 = vunpack.c.l.b16 %v1322
        %v1608 = vunpack.c.l.b16 %v1323
        %v1609 = vunpack.c.l.b16 %v1326
        %v1610 = vunpack.c.l.b16 %v1327
        %v1611 = vunpack.c.l.b16 %v1330
        %v1612 = vunpack.c.l.b16 %v1331
        %v1613 = vunpack.c.l.b16 %v1334
        %v1614 = vunpack.c.l.b16 %v1335
        %v1615 = vunpack.c.l.b16 %v1338
        %v1616 = vunpack.c.l.b16 %v1339
        %v1617 = vpack.c.b16 %v1602, %v1601
        %v1618 = vpack.c.b16 %v1604, %v1603
        %v1619 = vpack.c.b16 %v1606, %v1605
        %v1620 = vpack.c.b16 %v1608, %v1607
        %v1621 = vpack.c.b16 %v1610, %v1609
        %v1622 = vpack.c.b16 %v1612, %v1611
        %v1623 = vpack.c.b16 %v1614, %v1613
        %v1624 = vpack.c.b16 %v1616, %v1615
        %v1649 = vunpack.c.l.b16 %v1569
        %v1650 = vunpack.c.l.b16 %v1570
        %v1651 = vunpack.c.l.b16 %v1571
        %v1652 = vunpack.c.l.b16 %v1572
        %v1653 = vunpack.c.l.b16 %v1573
        %v1654 = vunpack.c.l.b16 %v1574
        %v1655 = vunpack.c.l.b16 %v1575
        %v1656 = vunpack.c.l.b16 %v1576
        %v1657 = vunpack.c.l.b16 %v1577
        %v1658 = vunpack.c.l.b16 %v1578
        %v1659 = vunpack.c.l.b16 %v1579
        %v1660 = vunpack.c.l.b16 %v1580
        %v1661 = vunpack.c.l.b16 %v1581
        %v1662 = vunpack.c.l.b16 %v1582
        %v1663 = vunpack.c.l.b16 %v1583
        %v1664 = vunpack.c.l.b16 %v1584
        %v1665 = vpack.c.b16 %v1650, %v1649
        %v1666 = vpack.c.b16 %v1652, %v1651
        %v1667 = vpack.c.b16 %v1654, %v1653
        %v1668 = vpack.c.b16 %v1656, %v1655
        %v1669 = vpack.c.b16 %v1658, %v1657
        %v1670 = vpack.c.b16 %v1660, %v1659
        %v1671 = vpack.c.b16 %v1662, %v1661
        %v1672 = vpack.c.b16 %v1664, %v1663
        %1681 = vmatprep.subr.bf16.mxu0 0
        %1682 = vmatpush1.bf16.msra.mxu0 %v1665
        %1683 = vmatprep.subr.bf16.mxu0 0
        %1684 = vmatpush1.bf16.msra.mxu0 %v1666
        %1685 = vmatprep.subr.bf16.mxu0 0
        %1686 = vmatpush1.bf16.msra.mxu0 %v1667
        %1687 = vmatprep.subr.bf16.mxu0 0
        %1688 = vmatpush1.bf16.msra.mxu0 %v1668
        %1689 = vmatprep.subr.bf16.mxu0 0
        %1690 = vmatpush1.bf16.msra.mxu0 %v1669
        %1691 = vmatprep.subr.bf16.mxu0 0
        %1692 = vmatpush1.bf16.msra.mxu0 %v1670
        %1693 = vmatprep.subr.bf16.mxu0 0
        %1694 = vmatpush1.bf16.msra.mxu0 %v1671
        %1695 = vmatprep.subr.bf16.mxu0 0
        %1696 = vmatpush1.bf16.msra.mxu0 %v1672
        %1697 = vmatprep.subr.bf16.mxu0 0
        %1698 = vmatpush1.bf16.msra.mxu0 0
        %1699 = vmatprep.subr.bf16.mxu0 0
        %1700 = vmatpush1.bf16.msra.mxu0 0
        %1701 = vmatprep.subr.bf16.mxu0 0
        %1702 = vmatpush1.bf16.msra.mxu0 0
        %1703 = vmatprep.subr.bf16.mxu0 0
        %1704 = vmatpush1.bf16.msra.mxu0 0
        %1705 = vmatprep.subr.bf16.mxu0 0
        %1706 = vmatpush1.bf16.msra.mxu0 0
        %1707 = vmatprep.subr.bf16.mxu0 0
        %1708 = vmatpush1.bf16.msra.mxu0 0
        %1709 = vmatprep.subr.bf16.mxu0 0
        %1710 = vmatpush1.bf16.msra.mxu0 0
        %1711 = vmatprep.subr.bf16.mxu0 0
        %1712 = vmatpush1.bf16.msra.mxu0 0
        %1713 = vmatprep.mubr.bf16.mxu0 0
        %1714 = vmatmul.mubr.bf16.gmra.mrb[0].mxu0 %v1617
        %v1715 = vpop.f32.mrb[0].mxu0
        %v1716 = vadd.f32 0.0, %v1715
        %v1717 = vpop.f32.mrb[0].mxu0
        %v1718 = vpop.f32.mrb[0].mxu0
        %v1719 = vadd.f32 0.0, %v1718
        %v1720 = vpop.f32.mrb[0].mxu0
        %1721 = vmatprep.mubr.bf16.mxu0 0
        %1722 = vmatmul.mubr.bf16.gmra.mrb[0].mxu0 %v1618
        %v1723 = vpop.f32.mrb[0].mxu0
        %v1724 = vadd.f32 0.0, %v1723
        %v1725 = vpop.f32.mrb[0].mxu0
        %v1726 = vpop.f32.mrb[0].mxu0
        %v1727 = vadd.f32 0.0, %v1726
        %v1728 = vpop.f32.mrb[0].mxu0
        %1729 = vmatprep.mubr.bf16.mxu0 0
        %1730 = vmatmul.mubr.bf16.gmra.mrb[0].mxu0 %v1619
        %v1731 = vpop.f32.mrb[0].mxu0
        %v1732 = vadd.f32 0.0, %v1731
        %v1733 = vpop.f32.mrb[0].mxu0
        %v1734 = vpop.f32.mrb[0].mxu0
        %v1735 = vadd.f32 0.0, %v1734
        %v1736 = vpop.f32.mrb[0].mxu0
        %1737 = vmatprep.mubr.bf16.mxu0 0
        %1738 = vmatmul.mubr.bf16.gmra.mrb[0].mxu0 %v1620
        %v1739 = vpop.f32.mrb[0].mxu0
        %v1740 = vadd.f32 0.0, %v1739
        %v1741 = vpop.f32.mrb[0].mxu0
        %v1742 = vpop.f32.mrb[0].mxu0
        %v1743 = vadd.f32 0.0, %v1742
        %v1744 = vpop.f32.mrb[0].mxu0
        %1745 = vmatprep.mubr.bf16.mxu0 0
        %1746 = vmatmul.mubr.bf16.gmra.mrb[0].mxu0 %v1621
        %v1747 = vpop.f32.mrb[0].mxu0
        %v1748 = vadd.f32 0.0, %v1747
        %v1749 = vpop.f32.mrb[0].mxu0
        %v1750 = vpop.f32.mrb[0].mxu0
        %v1751 = vadd.f32 0.0, %v1750
        %v1752 = vpop.f32.mrb[0].mxu0
        %1753 = vmatprep.mubr.bf16.mxu0 0
        %1754 = vmatmul.mubr.bf16.gmra.mrb[0].mxu0 %v1622
        %v1755 = vpop.f32.mrb[0].mxu0
        %v1756 = vadd.f32 0.0, %v1755
        %v1757 = vpop.f32.mrb[0].mxu0
        %v1758 = vpop.f32.mrb[0].mxu0
        %v1759 = vadd.f32 0.0, %v1758
        %v1760 = vpop.f32.mrb[0].mxu0
        %1761 = vmatprep.mubr.bf16.mxu0 0
        %1762 = vmatmul.mubr.bf16.gmra.mrb[0].mxu0 %v1623
        %v1763 = vpop.f32.mrb[0].mxu0
        %v1764 = vadd.f32 0.0, %v1763
        %v1765 = vpop.f32.mrb[0].mxu0
        %v1766 = vpop.f32.mrb[0].mxu0
        %v1767 = vadd.f32 0.0, %v1766
        %v1768 = vpop.f32.mrb[0].mxu0
        %1769 = vmatprep.mubr.bf16.mxu0 0
        %1770 = vmatmul.mubr.bf16.gmra.mrb[0].mxu0 %v1624
        %v1771 = vpop.f32.mrb[0].mxu0
        %v1772 = vadd.f32 0.0, %v1771
        %v1773 = vpop.f32.mrb[0].mxu0
        %v1774 = vpop.f32.mrb[0].mxu0
        %v1775 = vadd.f32 0.0, %v1774
        %v1776 = vpop.f32.mrb[0].mxu0
        %1777 = vdwg.mxu0
        %v1778 = vadd.f32 %v1552, %v1716
        %v1779 = vadd.f32 %v1553, %v1719
        %v1780 = vadd.f32 %v1554, %v1724
        %v1781 = vadd.f32 %v1555, %v1727
        %v1782 = vadd.f32 %v1556, %v1732
        %v1783 = vadd.f32 %v1557, %v1735
        %v1784 = vadd.f32 %v1558, %v1740
        %v1785 = vadd.f32 %v1559, %v1743
        %v1786 = vadd.f32 %v1560, %v1748
        %v1787 = vadd.f32 %v1561, %v1751
        %v1788 = vadd.f32 %v1562, %v1756
        %v1789 = vadd.f32 %v1563, %v1759
        %v1790 = vadd.f32 %v1564, %v1764
        %v1791 = vadd.f32 %v1565, %v1767
        %v1792 = vadd.f32 %v1566, %v1772
        %v1793 = vadd.f32 %v1567, %v1775
        %s1794 = scalar_lea.vmem [#allocation13], 448
        %v1795 = vld [vmem:[%s1794] sm:$0xf]
        %v1796 = vld [vmem:[%s1794 + $0x4] sm:$0xf]
        %v1797 = vld [vmem:[%s1794 + $0x8] sm:$0xf]
        %v1798 = vld [vmem:[%s1794 + $0xc] sm:$0xf]
        %v1799 = vld [vmem:[%s1794 + $0x10] sm:$0xf]
        %v1800 = vld [vmem:[%s1794 + $0x14] sm:$0xf]
        %v1801 = vld [vmem:[%s1794 + $0x18] sm:$0xf]
        %v1802 = vld [vmem:[%s1794 + $0x1c] sm:$0xf]
        %v1803 = vld [vmem:[%s1794 + $0x20] sm:$0xf]
        %v1804 = vld [vmem:[%s1794 + $0x24] sm:$0xf]
        %v1805 = vld [vmem:[%s1794 + $0x28] sm:$0xf]
        %v1806 = vld [vmem:[%s1794 + $0x2c] sm:$0xf]
        %v1807 = vld [vmem:[%s1794 + $0x30] sm:$0xf]
        %v1808 = vld [vmem:[%s1794 + $0x34] sm:$0xf]
        %v1809 = vld [vmem:[%s1794 + $0x38] sm:$0xf]
        %v1810 = vld [vmem:[%s1794 + $0x3c] sm:$0xf]
        %v1813 = vunpack.c.l.b16 %v1340
        %v1814 = vunpack.c.l.b16 %v1341
        %v1815 = vpack.c.b16 %v1814, %v1813
        %v1833 = vunpack.c.l.b16 %v1795
        %v1834 = vunpack.c.l.b16 %v1796
        %v1835 = vunpack.c.l.b16 %v1797
        %v1836 = vunpack.c.l.b16 %v1798
        %v1837 = vunpack.c.l.b16 %v1799
        %v1838 = vunpack.c.l.b16 %v1800
        %v1839 = vunpack.c.l.b16 %v1801
        %v1840 = vunpack.c.l.b16 %v1802
        %v1841 = vunpack.c.l.b16 %v1803
        %v1842 = vunpack.c.l.b16 %v1804
        %v1843 = vunpack.c.l.b16 %v1805
        %v1844 = vunpack.c.l.b16 %v1806
        %v1845 = vunpack.c.l.b16 %v1807
        %v1846 = vunpack.c.l.b16 %v1808
        %v1847 = vunpack.c.l.b16 %v1809
        %v1848 = vunpack.c.l.b16 %v1810
        %v1849 = vpack.c.b16 %v1834, %v1833
        %v1850 = vpack.c.b16 %v1836, %v1835
        %v1851 = vpack.c.b16 %v1838, %v1837
        %v1852 = vpack.c.b16 %v1840, %v1839
        %v1853 = vpack.c.b16 %v1842, %v1841
        %v1854 = vpack.c.b16 %v1844, %v1843
        %v1855 = vpack.c.b16 %v1846, %v1845
        %v1856 = vpack.c.b16 %v1848, %v1847
        %1865 = vmatprep.subr.bf16.mxu0 0
        %1866 = vmatpush1.bf16.msra.mxu0 %v1849
        %1867 = vmatprep.subr.bf16.mxu0 0
        %1868 = vmatpush1.bf16.msra.mxu0 %v1850
        %1869 = vmatprep.subr.bf16.mxu0 0
        %1870 = vmatpush1.bf16.msra.mxu0 %v1851
        %1871 = vmatprep.subr.bf16.mxu0 0
        %1872 = vmatpush1.bf16.msra.mxu0 %v1852
        %1873 = vmatprep.subr.bf16.mxu0 0
        %1874 = vmatpush1.bf16.msra.mxu0 %v1853
        %1875 = vmatprep.subr.bf16.mxu0 0
        %1876 = vmatpush1.bf16.msra.mxu0 %v1854
        %1877 = vmatprep.subr.bf16.mxu0 0
        %1878 = vmatpush1.bf16.msra.mxu0 %v1855
        %1879 = vmatprep.subr.bf16.mxu0 0
        %1880 = vmatpush1.bf16.msra.mxu0 %v1856
        %1881 = vmatprep.subr.bf16.mxu0 0
        %1882 = vmatpush1.bf16.msra.mxu0 0
        %1883 = vmatprep.subr.bf16.mxu0 0
        %1884 = vmatpush1.bf16.msra.mxu0 0
        %1885 = vmatprep.subr.bf16.mxu0 0
        %1886 = vmatpush1.bf16.msra.mxu0 0
        %1887 = vmatprep.subr.bf16.mxu0 0
        %1888 = vmatpush1.bf16.msra.mxu0 0
        %1889 = vmatprep.subr.bf16.mxu0 0
        %1890 = vmatpush1.bf16.msra.mxu0 0
        %1891 = vmatprep.subr.bf16.mxu0 0
        %1892 = vmatpush1.bf16.msra.mxu0 0
        %1893 = vmatprep.subr.bf16.mxu0 0
        %1894 = vmatpush1.bf16.msra.mxu0 0
        %1895 = vmatprep.subr.bf16.mxu0 0
        %1896 = vmatpush1.bf16.msra.mxu0 0
        %1897 = vmatprep.mubr.bf16.mxu0 0
        %1898 = vmatmul.mubr.bf16.gmra.mrb[0].mxu0 %v1392
        %v1899 = vpop.f32.mrb[0].mxu0
        %v1900 = vadd.f32 0.0, %v1899
        %v1901 = vpop.f32.mrb[0].mxu0
        %v1902 = vpop.f32.mrb[0].mxu0
        %v1903 = vadd.f32 0.0, %v1902
        %v1904 = vpop.f32.mrb[0].mxu0
        %1905 = vmatprep.mubr.bf16.mxu0 0
        %1906 = vmatmul.mubr.bf16.gmra.mrb[0].mxu0 %v1393
        %v1907 = vpop.f32.mrb[0].mxu0
        %v1908 = vadd.f32 0.0, %v1907
        %v1909 = vpop.f32.mrb[0].mxu0
        %v1910 = vpop.f32.mrb[0].mxu0
        %v1911 = vadd.f32 0.0, %v1910
        %v1912 = vpop.f32.mrb[0].mxu0
        %1913 = vmatprep.mubr.bf16.mxu0 0
        %1914 = vmatmul.mubr.bf16.gmra.mrb[0].mxu0 %v1394
        %v1915 = vpop.f32.mrb[0].mxu0
        %v1916 = vadd.f32 0.0, %v1915
        %v1917 = vpop.f32.mrb[0].mxu0
        %v1918 = vpop.f32.mrb[0].mxu0
        %v1919 = vadd.f32 0.0, %v1918
        %v1920 = vpop.f32.mrb[0].mxu0
        %1921 = vmatprep.mubr.bf16.mxu0 0
        %1922 = vmatmul.mubr.bf16.gmra.mrb[0].mxu0 %v1395
        %v1923 = vpop.f32.mrb[0].mxu0
        %v1924 = vadd.f32 0.0, %v1923
        %v1925 = vpop.f32.mrb[0].mxu0
        %v1926 = vpop.f32.mrb[0].mxu0
        %v1927 = vadd.f32 0.0, %v1926
        %v1928 = vpop.f32.mrb[0].mxu0
        %1929 = vmatprep.mubr.bf16.mxu0 0
        %1930 = vmatmul.mubr.bf16.gmra.mrb[0].mxu0 %v1396
        %v1931 = vpop.f32.mrb[0].mxu0
        %v1932 = vadd.f32 0.0, %v1931
        %v1933 = vpop.f32.mrb[0].mxu0
        %v1934 = vpop.f32.mrb[0].mxu0
        %v1935 = vadd.f32 0.0, %v1934
        %v1936 = vpop.f32.mrb[0].mxu0
        %1937 = vmatprep.mubr.bf16.mxu0 0
        %1938 = vmatmul.mubr.bf16.gmra.mrb[0].mxu0 %v1397
        %v1939 = vpop.f32.mrb[0].mxu0
        %v1940 = vadd.f32 0.0, %v1939
        %v1941 = vpop.f32.mrb[0].mxu0
        %v1942 = vpop.f32.mrb[0].mxu0
        %v1943 = vadd.f32 0.0, %v1942
        %v1944 = vpop.f32.mrb[0].mxu0
        %1945 = vmatprep.mubr.bf16.mxu0 0
        %1946 = vmatmul.mubr.bf16.gmra.mrb[0].mxu0 %v1398
        %v1947 = vpop.f32.mrb[0].mxu0
        %v1948 = vadd.f32 0.0, %v1947
        %v1949 = vpop.f32.mrb[0].mxu0
        %v1950 = vpop.f32.mrb[0].mxu0
        %v1951 = vadd.f32 0.0, %v1950
        %v1952 = vpop.f32.mrb[0].mxu0
        %1953 = vmatprep.mubr.bf16.mxu0 0
        %1954 = vmatmul.mubr.bf16.gmra.mrb[0].mxu0 %v1815
        %v1955 = vpop.f32.mrb[0].mxu0
        %v1956 = vadd.f32 0.0, %v1955
        %v1957 = vpop.f32.mrb[0].mxu0
        %v1958 = vpop.f32.mrb[0].mxu0
        %v1959 = vadd.f32 0.0, %v1958
        %v1960 = vpop.f32.mrb[0].mxu0
        %1961 = vdwg.mxu0
        %v1962 = vadd.f32 %v1778, %v1900
        %v1963 = vadd.f32 %v1779, %v1903
        %v1964 = vadd.f32 %v1780, %v1908
        %v1965 = vadd.f32 %v1781, %v1911
        %v1966 = vadd.f32 %v1782, %v1916
        %v1967 = vadd.f32 %v1783, %v1919
        %v1968 = vadd.f32 %v1784, %v1924
        %v1969 = vadd.f32 %v1785, %v1927
        %v1970 = vadd.f32 %v1786, %v1932
        %v1971 = vadd.f32 %v1787, %v1935
        %v1972 = vadd.f32 %v1788, %v1940
        %v1973 = vadd.f32 %v1789, %v1943
        %v1974 = vadd.f32 %v1790, %v1948
        %v1975 = vadd.f32 %v1791, %v1951
        %v1976 = vadd.f32 %v1792, %v1956
        %v1977 = vadd.f32 %v1793, %v1959
        %v1978 = vld [vmem:[%s568] sm:$0xf]
        %v1979 = vld [vmem:[%s568 + $0x4] sm:$0xf]
        %v1980 = vld [vmem:[%s568 + $0x8] sm:$0xf]
        %v1981 = vld [vmem:[%s568 + $0xc] sm:$0xf]
        %v1982 = vld [vmem:[%s568 + $0x10] sm:$0xf]
        %v1983 = vld [vmem:[%s568 + $0x14] sm:$0xf]
        %v1984 = vld [vmem:[%s568 + $0x18] sm:$0xf]
        %v1985 = vld [vmem:[%s568 + $0x1c] sm:$0xf]
        %v1986 = vld [vmem:[%s568 + $0x20] sm:$0xf]
        %v1987 = vld [vmem:[%s568 + $0x24] sm:$0xf]
        %v1988 = vld [vmem:[%s568 + $0x28] sm:$0xf]
        %v1989 = vld [vmem:[%s568 + $0x2c] sm:$0xf]
        %v1990 = vld [vmem:[%s568 + $0x30] sm:$0xf]
        %v1991 = vld [vmem:[%s568 + $0x34] sm:$0xf]
        %v1992 = vld [vmem:[%s568 + $0x38] sm:$0xf]
        %v1993 = vld [vmem:[%s568 + $0x3c] sm:$0xf]
        %v1994 = vld [vmem:[%s568 + $0x40] sm:$0xf]
        %v1995 = vld [vmem:[%s568 + $0x44] sm:$0xf]
        %v1996 = vld [vmem:[%s568 + $0x48] sm:$0xf]
        %v1997 = vld [vmem:[%s568 + $0x4c] sm:$0xf]
        %v1998 = vld [vmem:[%s568 + $0x50] sm:$0xf]
        %v1999 = vld [vmem:[%s568 + $0x54] sm:$0xf]
        %v2000 = vld [vmem:[%s568 + $0x58] sm:$0xf]
        %v2001 = vld [vmem:[%s568 + $0x5c] sm:$0xf]
        %v2002 = vld [vmem:[%s568 + $0x60] sm:$0xf]
        %v2003 = vld [vmem:[%s568 + $0x64] sm:$0xf]
        %v2004 = vld [vmem:[%s568 + $0x68] sm:$0xf]
        %v2005 = vld [vmem:[%s568 + $0x6c] sm:$0xf]
        %v2006 = vld [vmem:[%s568 + $0x70] sm:$0xf]
        %v2007 = vld [vmem:[%s568 + $0x74] sm:$0xf]
        %v2008 = vld [vmem:[%s568 + $0x78] sm:$0xf]
        %v2009 = vld [vmem:[%s568 + $0x7c] sm:$0xf]
        %v2010 = vld [vmem:[%s577] sm:$0xf]
        %v2011 = vld [vmem:[%s577 + $0x4] sm:$0xf]
        %s2012 = scalar_lea.vmem [#allocation13], 128
        %v2013 = vld [vmem:[%s2012] sm:$0xf]
        %v2014 = vld [vmem:[%s2012 + $0x4] sm:$0xf]
        %v2015 = vld [vmem:[%s2012 + $0x8] sm:$0xf]
        %v2016 = vld [vmem:[%s2012 + $0xc] sm:$0xf]
        %v2017 = vld [vmem:[%s2012 + $0x10] sm:$0xf]
        %v2018 = vld [vmem:[%s2012 + $0x14] sm:$0xf]
        %v2019 = vld [vmem:[%s2012 + $0x18] sm:$0xf]
        %v2020 = vld [vmem:[%s2012 + $0x1c] sm:$0xf]
        %v2021 = vld [vmem:[%s2012 + $0x20] sm:$0xf]
        %v2022 = vld [vmem:[%s2012 + $0x24] sm:$0xf]
        %v2023 = vld [vmem:[%s2012 + $0x28] sm:$0xf]
        %v2024 = vld [vmem:[%s2012 + $0x2c] sm:$0xf]
        %v2025 = vld [vmem:[%s2012 + $0x30] sm:$0xf]
        %v2026 = vld [vmem:[%s2012 + $0x34] sm:$0xf]
        %v2027 = vld [vmem:[%s2012 + $0x38] sm:$0xf]
        %v2028 = vld [vmem:[%s2012 + $0x3c] sm:$0xf]
        %v2045 = vunpack.c.l.b16 %v1978
        %v2046 = vunpack.c.l.b16 %v1979
        %v2047 = vunpack.c.l.b16 %v1982
        %v2048 = vunpack.c.l.b16 %v1983
        %v2049 = vunpack.c.l.b16 %v1986
        %v2050 = vunpack.c.l.b16 %v1987
        %v2051 = vunpack.c.l.b16 %v1990
        %v2052 = vunpack.c.l.b16 %v1991
        %v2053 = vunpack.c.l.b16 %v1994
        %v2054 = vunpack.c.l.b16 %v1995
        %v2055 = vunpack.c.l.b16 %v1998
        %v2056 = vunpack.c.l.b16 %v1999
        %v2057 = vunpack.c.l.b16 %v2002
        %v2058 = vunpack.c.l.b16 %v2003
        %v2059 = vunpack.c.l.b16 %v2006
        %v2060 = vunpack.c.l.b16 %v2007
        %v2061 = vpack.c.b16 %v2046, %v2045
        %v2062 = vpack.c.b16 %v2048, %v2047
        %v2063 = vpack.c.b16 %v2050, %v2049
        %v2064 = vpack.c.b16 %v2052, %v2051
        %v2065 = vpack.c.b16 %v2054, %v2053
        %v2066 = vpack.c.b16 %v2056, %v2055
        %v2067 = vpack.c.b16 %v2058, %v2057
        %v2068 = vpack.c.b16 %v2060, %v2059
        %v2093 = vunpack.c.l.b16 %v2013
        %v2094 = vunpack.c.l.b16 %v2014
        %v2095 = vunpack.c.l.b16 %v2015
        %v2096 = vunpack.c.l.b16 %v2016
        %v2097 = vunpack.c.l.b16 %v2017
        %v2098 = vunpack.c.l.b16 %v2018
        %v2099 = vunpack.c.l.b16 %v2019
        %v2100 = vunpack.c.l.b16 %v2020
        %v2101 = vunpack.c.l.b16 %v2021
        %v2102 = vunpack.c.l.b16 %v2022
        %v2103 = vunpack.c.l.b16 %v2023
        %v2104 = vunpack.c.l.b16 %v2024
        %v2105 = vunpack.c.l.b16 %v2025
        %v2106 = vunpack.c.l.b16 %v2026
        %v2107 = vunpack.c.l.b16 %v2027
        %v2108 = vunpack.c.l.b16 %v2028
        %v2109 = vpack.c.b16 %v2094, %v2093
        %v2110 = vpack.c.b16 %v2096, %v2095
        %v2111 = vpack.c.b16 %v2098, %v2097
        %v2112 = vpack.c.b16 %v2100, %v2099
        %v2113 = vpack.c.b16 %v2102, %v2101
        %v2114 = vpack.c.b16 %v2104, %v2103
        %v2115 = vpack.c.b16 %v2106, %v2105
        %v2116 = vpack.c.b16 %v2108, %v2107
        %2125 = vmatprep.subr.bf16.mxu0 0
        %2126 = vmatpush1.bf16.msra.mxu0 %v2109
        %2127 = vmatprep.subr.bf16.mxu0 0
        %2128 = vmatpush1.bf16.msra.mxu0 %v2110
        %2129 = vmatprep.subr.bf16.mxu0 0
        %2130 = vmatpush1.bf16.msra.mxu0 %v2111
        %2131 = vmatprep.subr.bf16.mxu0 0
        %2132 = vmatpush1.bf16.msra.mxu0 %v2112
        %2133 = vmatprep.subr.bf16.mxu0 0
        %2134 = vmatpush1.bf16.msra.mxu0 %v2113
        %2135 = vmatprep.subr.bf16.mxu0 0
        %2136 = vmatpush1.bf16.msra.mxu0 %v2114
        %2137 = vmatprep.subr.bf16.mxu0 0
        %2138 = vmatpush1.bf16.msra.mxu0 %v2115
        %2139 = vmatprep.subr.bf16.mxu0 0
        %2140 = vmatpush1.bf16.msra.mxu0 %v2116
        %2141 = vmatprep.subr.bf16.mxu0 0
        %2142 = vmatpush1.bf16.msra.mxu0 0
        %2143 = vmatprep.subr.bf16.mxu0 0
        %2144 = vmatpush1.bf16.msra.mxu0 0
        %2145 = vmatprep.subr.bf16.mxu0 0
        %2146 = vmatpush1.bf16.msra.mxu0 0
        %2147 = vmatprep.subr.bf16.mxu0 0
        %2148 = vmatpush1.bf16.msra.mxu0 0
        %2149 = vmatprep.subr.bf16.mxu0 0
        %2150 = vmatpush1.bf16.msra.mxu0 0
        %2151 = vmatprep.subr.bf16.mxu0 0
        %2152 = vmatpush1.bf16.msra.mxu0 0
        %2153 = vmatprep.subr.bf16.mxu0 0
        %2154 = vmatpush1.bf16.msra.mxu0 0
        %2155 = vmatprep.subr.bf16.mxu0 0
        %2156 = vmatpush1.bf16.msra.mxu0 0
        %2157 = vmatprep.mubr.bf16.mxu0 0
        %2158 = vmatmul.mubr.bf16.gmra.mrb[0].mxu0 %v2061
        %v2159 = vpop.f32.mrb[0].mxu0
        %v2160 = vadd.f32 0.0, %v2159
        %v2161 = vpop.f32.mrb[0].mxu0
        %v2162 = vpop.f32.mrb[0].mxu0
        %v2163 = vadd.f32 0.0, %v2162
        %v2164 = vpop.f32.mrb[0].mxu0
        %2165 = vmatprep.mubr.bf16.mxu0 0
        %2166 = vmatmul.mubr.bf16.gmra.mrb[0].mxu0 %v2062
        %v2167 = vpop.f32.mrb[0].mxu0
        %v2168 = vadd.f32 0.0, %v2167
        %v2169 = vpop.f32.mrb[0].mxu0
        %v2170 = vpop.f32.mrb[0].mxu0
        %v2171 = vadd.f32 0.0, %v2170
        %v2172 = vpop.f32.mrb[0].mxu0
        %2173 = vmatprep.mubr.bf16.mxu0 0
        %2174 = vmatmul.mubr.bf16.gmra.mrb[0].mxu0 %v2063
        %v2175 = vpop.f32.mrb[0].mxu0
        %v2176 = vadd.f32 0.0, %v2175
        %v2177 = vpop.f32.mrb[0].mxu0
        %v2178 = vpop.f32.mrb[0].mxu0
        %v2179 = vadd.f32 0.0, %v2178
        %v2180 = vpop.f32.mrb[0].mxu0
        %2181 = vmatprep.mubr.bf16.mxu0 0
        %2182 = vmatmul.mubr.bf16.gmra.mrb[0].mxu0 %v2064
        %v2183 = vpop.f32.mrb[0].mxu0
        %v2184 = vadd.f32 0.0, %v2183
        %v2185 = vpop.f32.mrb[0].mxu0
        %v2186 = vpop.f32.mrb[0].mxu0
        %v2187 = vadd.f32 0.0, %v2186
        %v2188 = vpop.f32.mrb[0].mxu0
        %2189 = vmatprep.mubr.bf16.mxu0 0
        %2190 = vmatmul.mubr.bf16.gmra.mrb[0].mxu0 %v2065
        %v2191 = vpop.f32.mrb[0].mxu0
        %v2192 = vadd.f32 0.0, %v2191
        %v2193 = vpop.f32.mrb[0].mxu0
        %v2194 = vpop.f32.mrb[0].mxu0
        %v2195 = vadd.f32 0.0, %v2194
        %v2196 = vpop.f32.mrb[0].mxu0
        %2197 = vmatprep.mubr.bf16.mxu0 0
        %2198 = vmatmul.mubr.bf16.gmra.mrb[0].mxu0 %v2066
        %v2199 = vpop.f32.mrb[0].mxu0
        %v2200 = vadd.f32 0.0, %v2199
        %v2201 = vpop.f32.mrb[0].mxu0
        %v2202 = vpop.f32.mrb[0].mxu0
        %v2203 = vadd.f32 0.0, %v2202
        %v2204 = vpop.f32.mrb[0].mxu0
        %2205 = vmatprep.mubr.bf16.mxu0 0
        %2206 = vmatmul.mubr.bf16.gmra.mrb[0].mxu0 %v2067
        %v2207 = vpop.f32.mrb[0].mxu0
        %v2208 = vadd.f32 0.0, %v2207
        %v2209 = vpop.f32.mrb[0].mxu0
        %v2210 = vpop.f32.mrb[0].mxu0
        %v2211 = vadd.f32 0.0, %v2210
        %v2212 = vpop.f32.mrb[0].mxu0
        %2213 = vmatprep.mubr.bf16.mxu0 0
        %2214 = vmatmul.mubr.bf16.gmra.mrb[0].mxu0 %v2068
        %v2215 = vpop.f32.mrb[0].mxu0
        %v2216 = vadd.f32 0.0, %v2215
        %v2217 = vpop.f32.mrb[0].mxu0
        %v2218 = vpop.f32.mrb[0].mxu0
        %v2219 = vadd.f32 0.0, %v2218
        %v2220 = vpop.f32.mrb[0].mxu0
        %2221 = vdwg.mxu0
        %v2222 = vadd.f32 %v1962, %v2160
        %v2223 = vadd.f32 %v1963, %v2163
        %v2224 = vadd.f32 %v1964, %v2168
        %v2225 = vadd.f32 %v1965, %v2171
        %v2226 = vadd.f32 %v1966, %v2176
        %v2227 = vadd.f32 %v1967, %v2179
        %v2228 = vadd.f32 %v1968, %v2184
        %v2229 = vadd.f32 %v1969, %v2187
        %v2230 = vadd.f32 %v1970, %v2192
        %v2231 = vadd.f32 %v1971, %v2195
        %v2232 = vadd.f32 %v1972, %v2200
        %v2233 = vadd.f32 %v1973, %v2203
        %v2234 = vadd.f32 %v1974, %v2208
        %v2235 = vadd.f32 %v1975, %v2211
        %v2236 = vadd.f32 %v1976, %v2216
        %v2237 = vadd.f32 %v1977, %v2219
        %s2238 = scalar_lea.vmem [#allocation13], 320
        %v2239 = vld [vmem:[%s2238] sm:$0xf]
        %v2240 = vld [vmem:[%s2238 + $0x4] sm:$0xf]
        %v2241 = vld [vmem:[%s2238 + $0x8] sm:$0xf]
        %v2242 = vld [vmem:[%s2238 + $0xc] sm:$0xf]
        %v2243 = vld [vmem:[%s2238 + $0x10] sm:$0xf]
        %v2244 = vld [vmem:[%s2238 + $0x14] sm:$0xf]
        %v2245 = vld [vmem:[%s2238 + $0x18] sm:$0xf]
        %v2246 = vld [vmem:[%s2238 + $0x1c] sm:$0xf]
        %v2247 = vld [vmem:[%s2238 + $0x20] sm:$0xf]
        %v2248 = vld [vmem:[%s2238 + $0x24] sm:$0xf]
        %v2249 = vld [vmem:[%s2238 + $0x28] sm:$0xf]
        %v2250 = vld [vmem:[%s2238 + $0x2c] sm:$0xf]
        %v2251 = vld [vmem:[%s2238 + $0x30] sm:$0xf]
        %v2252 = vld [vmem:[%s2238 + $0x34] sm:$0xf]
        %v2253 = vld [vmem:[%s2238 + $0x38] sm:$0xf]
        %v2254 = vld [vmem:[%s2238 + $0x3c] sm:$0xf]
        %v2271 = vunpack.c.l.b16 %v1980
        %v2272 = vunpack.c.l.b16 %v1981
        %v2273 = vunpack.c.l.b16 %v1984
        %v2274 = vunpack.c.l.b16 %v1985
        %v2275 = vunpack.c.l.b16 %v1988
        %v2276 = vunpack.c.l.b16 %v1989
        %v2277 = vunpack.c.l.b16 %v1992
        %v2278 = vunpack.c.l.b16 %v1993
        %v2279 = vunpack.c.l.b16 %v1996
        %v2280 = vunpack.c.l.b16 %v1997
        %v2281 = vunpack.c.l.b16 %v2000
        %v2282 = vunpack.c.l.b16 %v2001
        %v2283 = vunpack.c.l.b16 %v2004
        %v2284 = vunpack.c.l.b16 %v2005
        %v2285 = vunpack.c.l.b16 %v2008
        %v2286 = vunpack.c.l.b16 %v2009
        %v2287 = vpack.c.b16 %v2272, %v2271
        %v2288 = vpack.c.b16 %v2274, %v2273
        %v2289 = vpack.c.b16 %v2276, %v2275
        %v2290 = vpack.c.b16 %v2278, %v2277
        %v2291 = vpack.c.b16 %v2280, %v2279
        %v2292 = vpack.c.b16 %v2282, %v2281
        %v2293 = vpack.c.b16 %v2284, %v2283
        %v2294 = vpack.c.b16 %v2286, %v2285
        %v2319 = vunpack.c.l.b16 %v2239
        %v2320 = vunpack.c.l.b16 %v2240
        %v2321 = vunpack.c.l.b16 %v2241
        %v2322 = vunpack.c.l.b16 %v2242
        %v2323 = vunpack.c.l.b16 %v2243
        %v2324 = vunpack.c.l.b16 %v2244
        %v2325 = vunpack.c.l.b16 %v2245
        %v2326 = vunpack.c.l.b16 %v2246
        %v2327 = vunpack.c.l.b16 %v2247
        %v2328 = vunpack.c.l.b16 %v2248
        %v2329 = vunpack.c.l.b16 %v2249
        %v2330 = vunpack.c.l.b16 %v2250
        %v2331 = vunpack.c.l.b16 %v2251
        %v2332 = vunpack.c.l.b16 %v2252
        %v2333 = vunpack.c.l.b16 %v2253
        %v2334 = vunpack.c.l.b16 %v2254
        %v2335 = vpack.c.b16 %v2320, %v2319
        %v2336 = vpack.c.b16 %v2322, %v2321
        %v2337 = vpack.c.b16 %v2324, %v2323
        %v2338 = vpack.c.b16 %v2326, %v2325
        %v2339 = vpack.c.b16 %v2328, %v2327
        %v2340 = vpack.c.b16 %v2330, %v2329
        %v2341 = vpack.c.b16 %v2332, %v2331
        %v2342 = vpack.c.b16 %v2334, %v2333
        %2351 = vmatprep.subr.bf16.mxu0 0
        %2352 = vmatpush1.bf16.msra.mxu0 %v2335
        %2353 = vmatprep.subr.bf16.mxu0 0
        %2354 = vmatpush1.bf16.msra.mxu0 %v2336
        %2355 = vmatprep.subr.bf16.mxu0 0
        %2356 = vmatpush1.bf16.msra.mxu0 %v2337
        %2357 = vmatprep.subr.bf16.mxu0 0
        %2358 = vmatpush1.bf16.msra.mxu0 %v2338
        %2359 = vmatprep.subr.bf16.mxu0 0
        %2360 = vmatpush1.bf16.msra.mxu0 %v2339
        %2361 = vmatprep.subr.bf16.mxu0 0
        %2362 = vmatpush1.bf16.msra.mxu0 %v2340
        %2363 = vmatprep.subr.bf16.mxu0 0
        %2364 = vmatpush1.bf16.msra.mxu0 %v2341
        %2365 = vmatprep.subr.bf16.mxu0 0
        %2366 = vmatpush1.bf16.msra.mxu0 %v2342
        %2367 = vmatprep.subr.bf16.mxu0 0
        %2368 = vmatpush1.bf16.msra.mxu0 0
        %2369 = vmatprep.subr.bf16.mxu0 0
        %2370 = vmatpush1.bf16.msra.mxu0 0
        %2371 = vmatprep.subr.bf16.mxu0 0
        %2372 = vmatpush1.bf16.msra.mxu0 0
        %2373 = vmatprep.subr.bf16.mxu0 0
        %2374 = vmatpush1.bf16.msra.mxu0 0
        %2375 = vmatprep.subr.bf16.mxu0 0
        %2376 = vmatpush1.bf16.msra.mxu0 0
        %2377 = vmatprep.subr.bf16.mxu0 0
        %2378 = vmatpush1.bf16.msra.mxu0 0
        %2379 = vmatprep.subr.bf16.mxu0 0
        %2380 = vmatpush1.bf16.msra.mxu0 0
        %2381 = vmatprep.subr.bf16.mxu0 0
        %2382 = vmatpush1.bf16.msra.mxu0 0
        %2383 = vmatprep.mubr.bf16.mxu0 0
        %2384 = vmatmul.mubr.bf16.gmra.mrb[0].mxu0 %v2287
        %v2385 = vpop.f32.mrb[0].mxu0
        %v2386 = vadd.f32 0.0, %v2385
        %v2387 = vpop.f32.mrb[0].mxu0
        %v2388 = vpop.f32.mrb[0].mxu0
        %v2389 = vadd.f32 0.0, %v2388
        %v2390 = vpop.f32.mrb[0].mxu0
        %2391 = vmatprep.mubr.bf16.mxu0 0
        %2392 = vmatmul.mubr.bf16.gmra.mrb[0].mxu0 %v2288
        %v2393 = vpop.f32.mrb[0].mxu0
        %v2394 = vadd.f32 0.0, %v2393
        %v2395 = vpop.f32.mrb[0].mxu0
        %v2396 = vpop.f32.mrb[0].mxu0
        %v2397 = vadd.f32 0.0, %v2396
        %v2398 = vpop.f32.mrb[0].mxu0
        %2399 = vmatprep.mubr.bf16.mxu0 0
        %2400 = vmatmul.mubr.bf16.gmra.mrb[0].mxu0 %v2289
        %v2401 = vpop.f32.mrb[0].mxu0
        %v2402 = vadd.f32 0.0, %v2401
        %v2403 = vpop.f32.mrb[0].mxu0
        %v2404 = vpop.f32.mrb[0].mxu0
        %v2405 = vadd.f32 0.0, %v2404
        %v2406 = vpop.f32.mrb[0].mxu0
        %2407 = vmatprep.mubr.bf16.mxu0 0
        %2408 = vmatmul.mubr.bf16.gmra.mrb[0].mxu0 %v2290
        %v2409 = vpop.f32.mrb[0].mxu0
        %v2410 = vadd.f32 0.0, %v2409
        %v2411 = vpop.f32.mrb[0].mxu0
        %v2412 = vpop.f32.mrb[0].mxu0
        %v2413 = vadd.f32 0.0, %v2412
        %v2414 = vpop.f32.mrb[0].mxu0
        %2415 = vmatprep.mubr.bf16.mxu0 0
        %2416 = vmatmul.mubr.bf16.gmra.mrb[0].mxu0 %v2291
        %v2417 = vpop.f32.mrb[0].mxu0
        %v2418 = vadd.f32 0.0, %v2417
        %v2419 = vpop.f32.mrb[0].mxu0
        %v2420 = vpop.f32.mrb[0].mxu0
        %v2421 = vadd.f32 0.0, %v2420
        %v2422 = vpop.f32.mrb[0].mxu0
        %2423 = vmatprep.mubr.bf16.mxu0 0
        %2424 = vmatmul.mubr.bf16.gmra.mrb[0].mxu0 %v2292
        %v2425 = vpop.f32.mrb[0].mxu0
        %v2426 = vadd.f32 0.0, %v2425
        %v2427 = vpop.f32.mrb[0].mxu0
        %v2428 = vpop.f32.mrb[0].mxu0
        %v2429 = vadd.f32 0.0, %v2428
        %v2430 = vpop.f32.mrb[0].mxu0
        %2431 = vmatprep.mubr.bf16.mxu0 0
        %2432 = vmatmul.mubr.bf16.gmra.mrb[0].mxu0 %v2293
        %v2433 = vpop.f32.mrb[0].mxu0
        %v2434 = vadd.f32 0.0, %v2433
        %v2435 = vpop.f32.mrb[0].mxu0
        %v2436 = vpop.f32.mrb[0].mxu0
        %v2437 = vadd.f32 0.0, %v2436
        %v2438 = vpop.f32.mrb[0].mxu0
        %2439 = vmatprep.mubr.bf16.mxu0 0
        %2440 = vmatmul.mubr.bf16.gmra.mrb[0].mxu0 %v2294
        %v2441 = vpop.f32.mrb[0].mxu0
        %v2442 = vadd.f32 0.0, %v2441
        %v2443 = vpop.f32.mrb[0].mxu0
        %v2444 = vpop.f32.mrb[0].mxu0
        %v2445 = vadd.f32 0.0, %v2444
        %v2446 = vpop.f32.mrb[0].mxu0
        %2447 = vdwg.mxu0
        %v2448 = vadd.f32 %v2222, %v2386
        %v2449 = vadd.f32 %v2223, %v2389
        %v2450 = vadd.f32 %v2224, %v2394
        %v2451 = vadd.f32 %v2225, %v2397
        %v2452 = vadd.f32 %v2226, %v2402
        %v2453 = vadd.f32 %v2227, %v2405
        %v2454 = vadd.f32 %v2228, %v2410
        %v2455 = vadd.f32 %v2229, %v2413
        %v2456 = vadd.f32 %v2230, %v2418
        %v2457 = vadd.f32 %v2231, %v2421
        %v2458 = vadd.f32 %v2232, %v2426
        %v2459 = vadd.f32 %v2233, %v2429
        %v2460 = vadd.f32 %v2234, %v2434
        %v2461 = vadd.f32 %v2235, %v2437
        %v2462 = vadd.f32 %v2236, %v2442
        %v2463 = vadd.f32 %v2237, %v2445
        %s2464 = scalar_lea.vmem [#allocation13], 512
        %v2465 = vld [vmem:[%s2464] sm:$0xf]
        %v2466 = vld [vmem:[%s2464 + $0x4] sm:$0xf]
        %v2467 = vld [vmem:[%s2464 + $0x8] sm:$0xf]
        %v2468 = vld [vmem:[%s2464 + $0xc] sm:$0xf]
        %v2469 = vld [vmem:[%s2464 + $0x10] sm:$0xf]
        %v2470 = vld [vmem:[%s2464 + $0x14] sm:$0xf]
        %v2471 = vld [vmem:[%s2464 + $0x18] sm:$0xf]
        %v2472 = vld [vmem:[%s2464 + $0x1c] sm:$0xf]
        %v2473 = vld [vmem:[%s2464 + $0x20] sm:$0xf]
        %v2474 = vld [vmem:[%s2464 + $0x24] sm:$0xf]
        %v2475 = vld [vmem:[%s2464 + $0x28] sm:$0xf]
        %v2476 = vld [vmem:[%s2464 + $0x2c] sm:$0xf]
        %v2477 = vld [vmem:[%s2464 + $0x30] sm:$0xf]
        %v2478 = vld [vmem:[%s2464 + $0x34] sm:$0xf]
        %v2479 = vld [vmem:[%s2464 + $0x38] sm:$0xf]
        %v2480 = vld [vmem:[%s2464 + $0x3c] sm:$0xf]
        %v2483 = vunpack.c.l.b16 %v2010
        %v2484 = vunpack.c.l.b16 %v2011
        %v2485 = vpack.c.b16 %v2484, %v2483
        %v2503 = vunpack.c.l.b16 %v2465
        %v2504 = vunpack.c.l.b16 %v2466
        %v2505 = vunpack.c.l.b16 %v2467
        %v2506 = vunpack.c.l.b16 %v2468
        %v2507 = vunpack.c.l.b16 %v2469
        %v2508 = vunpack.c.l.b16 %v2470
        %v2509 = vunpack.c.l.b16 %v2471
        %v2510 = vunpack.c.l.b16 %v2472
        %v2511 = vunpack.c.l.b16 %v2473
        %v2512 = vunpack.c.l.b16 %v2474
        %v2513 = vunpack.c.l.b16 %v2475
        %v2514 = vunpack.c.l.b16 %v2476
        %v2515 = vunpack.c.l.b16 %v2477
        %v2516 = vunpack.c.l.b16 %v2478
        %v2517 = vunpack.c.l.b16 %v2479
        %v2518 = vunpack.c.l.b16 %v2480
        %v2519 = vpack.c.b16 %v2504, %v2503
        %v2520 = vpack.c.b16 %v2506, %v2505
        %v2521 = vpack.c.b16 %v2508, %v2507
        %v2522 = vpack.c.b16 %v2510, %v2509
        %v2523 = vpack.c.b16 %v2512, %v2511
        %v2524 = vpack.c.b16 %v2514, %v2513
        %v2525 = vpack.c.b16 %v2516, %v2515
        %v2526 = vpack.c.b16 %v2518, %v2517
        %2535 = vmatprep.subr.bf16.mxu0 0
        %2536 = vmatpush1.bf16.msra.mxu0 %v2519
        %2537 = vmatprep.subr.bf16.mxu0 0
        %2538 = vmatpush1.bf16.msra.mxu0 %v2520
        %2539 = vmatprep.subr.bf16.mxu0 0
        %2540 = vmatpush1.bf16.msra.mxu0 %v2521
        %2541 = vmatprep.subr.bf16.mxu0 0
        %2542 = vmatpush1.bf16.msra.mxu0 %v2522
        %2543 = vmatprep.subr.bf16.mxu0 0
        %2544 = vmatpush1.bf16.msra.mxu0 %v2523
        %2545 = vmatprep.subr.bf16.mxu0 0
        %2546 = vmatpush1.bf16.msra.mxu0 %v2524
        %2547 = vmatprep.subr.bf16.mxu0 0
        %2548 = vmatpush1.bf16.msra.mxu0 %v2525
        %2549 = vmatprep.subr.bf16.mxu0 0
        %2550 = vmatpush1.bf16.msra.mxu0 %v2526
        %2551 = vmatprep.subr.bf16.mxu0 0
        %2552 = vmatpush1.bf16.msra.mxu0 0
        %2553 = vmatprep.subr.bf16.mxu0 0
        %2554 = vmatpush1.bf16.msra.mxu0 0
        %2555 = vmatprep.subr.bf16.mxu0 0
        %2556 = vmatpush1.bf16.msra.mxu0 0
        %2557 = vmatprep.subr.bf16.mxu0 0
        %2558 = vmatpush1.bf16.msra.mxu0 0
        %2559 = vmatprep.subr.bf16.mxu0 0
        %2560 = vmatpush1.bf16.msra.mxu0 0
        %2561 = vmatprep.subr.bf16.mxu0 0
        %2562 = vmatpush1.bf16.msra.mxu0 0
        %2563 = vmatprep.subr.bf16.mxu0 0
        %2564 = vmatpush1.bf16.msra.mxu0 0
        %2565 = vmatprep.subr.bf16.mxu0 0
        %2566 = vmatpush1.bf16.msra.mxu0 0
        %2567 = vmatprep.mubr.bf16.mxu0 0
        %2568 = vmatmul.mubr.bf16.gmra.mrb[0].mxu0 %v2062
        %v2569 = vpop.f32.mrb[0].mxu0
        %v2570 = vadd.f32 0.0, %v2569
        %v2571 = vpop.f32.mrb[0].mxu0
        %v2572 = vpop.f32.mrb[0].mxu0
        %v2573 = vadd.f32 0.0, %v2572
        %v2574 = vpop.f32.mrb[0].mxu0
        %2575 = vmatprep.mubr.bf16.mxu0 0
        %2576 = vmatmul.mubr.bf16.gmra.mrb[0].mxu0 %v2063
        %v2577 = vpop.f32.mrb[0].mxu0
        %v2578 = vadd.f32 0.0, %v2577
        %v2579 = vpop.f32.mrb[0].mxu0
        %v2580 = vpop.f32.mrb[0].mxu0
        %v2581 = vadd.f32 0.0, %v2580
        %v2582 = vpop.f32.mrb[0].mxu0
        %2583 = vmatprep.mubr.bf16.mxu0 0
        %2584 = vmatmul.mubr.bf16.gmra.mrb[0].mxu0 %v2064
        %v2585 = vpop.f32.mrb[0].mxu0
        %v2586 = vadd.f32 0.0, %v2585
        %v2587 = vpop.f32.mrb[0].mxu0
        %v2588 = vpop.f32.mrb[0].mxu0
        %v2589 = vadd.f32 0.0, %v2588
        %v2590 = vpop.f32.mrb[0].mxu0
        %2591 = vmatprep.mubr.bf16.mxu0 0
        %2592 = vmatmul.mubr.bf16.gmra.mrb[0].mxu0 %v2065
        %v2593 = vpop.f32.mrb[0].mxu0
        %v2594 = vadd.f32 0.0, %v2593
        %v2595 = vpop.f32.mrb[0].mxu0
        %v2596 = vpop.f32.mrb[0].mxu0
        %v2597 = vadd.f32 0.0, %v2596
        %v2598 = vpop.f32.mrb[0].mxu0
        %2599 = vmatprep.mubr.bf16.mxu0 0
        %2600 = vmatmul.mubr.bf16.gmra.mrb[0].mxu0 %v2066
        %v2601 = vpop.f32.mrb[0].mxu0
        %v2602 = vadd.f32 0.0, %v2601
        %v2603 = vpop.f32.mrb[0].mxu0
        %v2604 = vpop.f32.mrb[0].mxu0
        %v2605 = vadd.f32 0.0, %v2604
        %v2606 = vpop.f32.mrb[0].mxu0
        %2607 = vmatprep.mubr.bf16.mxu0 0
        %2608 = vmatmul.mubr.bf16.gmra.mrb[0].mxu0 %v2067
        %v2609 = vpop.f32.mrb[0].mxu0
        %v2610 = vadd.f32 0.0, %v2609
        %v2611 = vpop.f32.mrb[0].mxu0
        %v2612 = vpop.f32.mrb[0].mxu0
        %v2613 = vadd.f32 0.0, %v2612
        %v2614 = vpop.f32.mrb[0].mxu0
        %2615 = vmatprep.mubr.bf16.mxu0 0
        %2616 = vmatmul.mubr.bf16.gmra.mrb[0].mxu0 %v2068
        %v2617 = vpop.f32.mrb[0].mxu0
        %v2618 = vadd.f32 0.0, %v2617
        %v2619 = vpop.f32.mrb[0].mxu0
        %v2620 = vpop.f32.mrb[0].mxu0
        %v2621 = vadd.f32 0.0, %v2620
        %v2622 = vpop.f32.mrb[0].mxu0
        %2623 = vmatprep.mubr.bf16.mxu0 0
        %2624 = vmatmul.mubr.bf16.gmra.mrb[0].mxu0 %v2485
        %v2625 = vpop.f32.mrb[0].mxu0
        %v2626 = vadd.f32 0.0, %v2625
        %v2627 = vpop.f32.mrb[0].mxu0
        %v2628 = vpop.f32.mrb[0].mxu0
        %v2629 = vadd.f32 0.0, %v2628
        %v2630 = vpop.f32.mrb[0].mxu0
        %2631 = vdwg.mxu0
        %v2632 = vadd.f32 %v2448, %v2570
        %v2633 = vadd.f32 %v2449, %v2573
        %v2634 = vadd.f32 %v2450, %v2578
        %v2635 = vadd.f32 %v2451, %v2581
        %v2636 = vadd.f32 %v2452, %v2586
        %v2637 = vadd.f32 %v2453, %v2589
        %v2638 = vadd.f32 %v2454, %v2594
        %v2639 = vadd.f32 %v2455, %v2597
        %v2640 = vadd.f32 %v2456, %v2602
        %v2641 = vadd.f32 %v2457, %v2605
        %v2642 = vadd.f32 %v2458, %v2610
        %v2643 = vadd.f32 %v2459, %v2613
        %v2644 = vadd.f32 %v2460, %v2618
        %v2645 = vadd.f32 %v2461, %v2621
        %v2646 = vadd.f32 %v2462, %v2626
        %v2647 = vadd.f32 %v2463, %v2629
        %v2648 = vld [vmem:[%s668] sm:$0x1]
        %v2650 = vlaneseq
        %v2651 = vshrl.u32 %v2650, 7
        %v2652 = vsub.s32 0, %v2651
        %v2653 = vrot.slane %v2648, %v2652
        %v2655 = vadd.f32 %v2632, %v2653
        %v2656 = vadd.f32 %v2633, %v2653
        %v2657 = vadd.f32 %v2634, %v2653
        %v2658 = vadd.f32 %v2635, %v2653
        %v2659 = vadd.f32 %v2636, %v2653
        %v2660 = vadd.f32 %v2637, %v2653
        %v2661 = vadd.f32 %v2638, %v2653
        %v2662 = vadd.f32 %v2639, %v2653
        %v2663 = vadd.f32 %v2640, %v2653
        %v2664 = vadd.f32 %v2641, %v2653
        %v2665 = vadd.f32 %v2642, %v2653
        %v2666 = vadd.f32 %v2643, %v2653
        %v2667 = vadd.f32 %v2644, %v2653
        %v2668 = vadd.f32 %v2645, %v2653
        %v2669 = vadd.f32 %v2646, %v2653
        %v2670 = vadd.f32 %v2647, %v2653
        %2671 = vst [vmem:[%s641] sm:$0xff] %v2655
        %2672 = vst [vmem:[%s641 + $0x8] sm:$0xff] %v2656
        %2673 = vst [vmem:[%s641 + $0x10] sm:$0xff] %v2657
        %2674 = vst [vmem:[%s641 + $0x18] sm:$0xff] %v2658
        %2675 = vst [vmem:[%s641 + $0x20] sm:$0xff] %v2659
        %2676 = vst [vmem:[%s641 + $0x28] sm:$0xff] %v2660
        %2677 = vst [vmem:[%s641 + $0x30] sm:$0xff] %v2661
        %2678 = vst [vmem:[%s641 + $0x38] sm:$0xff] %v2662
        %2679 = vst [vmem:[%s641 + $0x40] sm:$0xff] %v2663
        %2680 = vst [vmem:[%s641 + $0x48] sm:$0xff] %v2664
        %2681 = vst [vmem:[%s641 + $0x50] sm:$0xff] %v2665
        %2682 = vst [vmem:[%s641 + $0x58] sm:$0xff] %v2666
        %2683 = vst [vmem:[%s641 + $0x60] sm:$0xff] %v2667
        %2684 = vst [vmem:[%s641 + $0x68] sm:$0xff] %v2668
        %2685 = vst [vmem:[%s641 + $0x70] sm:$0xff] %v2669
        %2686 = vst [vmem:[%s641 + $0x78] sm:$0xff] %v2670
        %s2687 = sand.u32 %s297, 1
        %s2688 = scalar_lea.sflag [#allocation4], %s2687
        %s2689 = sand.u32 %s297, 1
        %s2690 = smul.addr %s2689, 128
        %s2691 = scalar_lea.vmem [#allocation14], %s2690
        // Predicated region
        $region81: #{tpu_custom_call.1} parent=51 // pred_check
          %p2692 = pneg %p307
        $region82: #{tpu_custom_call.1} parent=51 // pred_check_branch
          %2694 = sbr.rel (%p2692) target = $region84
        $region83: #{tpu_custom_call.1} parent=51 // pred_region
          %s2695 = smul.u32 16, %s41
          %s2697 = ssub.s32 2048, 2048
          %2698 = vsyncadd %s2688, %s2697
          %s2699 = sadd.s32 %s39, %s2695
          %s2700 = smul.addr %s40, 16
          %s2701 = sadd.s32 %s2699, %s2700
          %s2702 = smul.addr %s2701, 128
          %s2703 = scalar_lea.hbm %s8, %s2702
          %s2704 = sshll.u32 %s2691, 4
          %s2705 = int_to_ptr.vmem [resolvable:$true] %s2704
          %2710 = dma.vmem_to_hbm [thread:$0]  %s2705, 2048, %s2703, %s2688, 128, 128, 8
        $region84: #{tpu_custom_call.1} parent=51 // pred_fallthru
          _
      $region52: #{tpu_custom_call.1} parent=5 // pred_fallthru
        _
      %p2711 = scmp.le.s32.totalorder 2, %s29
      // Predicated region
      $region85: #{tpu_custom_call.1} parent=5 // pred_check
        %p2712 = pneg %p2711
      $region86: #{tpu_custom_call.1} parent=5 // pred_check_branch
        %2714 = sbr.rel (%p2712) target = $region88
      $region87: #{tpu_custom_call.1} parent=5 // pred_region
        %s2715 = ssub.s32 %s29, 2
        // Predicated region
        $region89: #{tpu_custom_call.1} parent=87 // pred_check
          %p2716 = pneg %p313
        $region90: #{tpu_custom_call.1} parent=87 // pred_check_branch
          %2718 = sbr.rel (%p2716) target = $region92
        $region91: #{tpu_custom_call.1} parent=87 // pred_region
          %s2719 = sand.u32 %s298, 1
          %s2720 = scalar_lea.sflag [#allocation4], %s2719
          %s2721 = sand.u32 %s298, 1
          %s2722 = smul.addr %s2721, 128
          %s2723 = scalar_lea.vmem [#allocation14], %s2722
          %2724 = dma.done %s2720, 2048
        $region92: #{tpu_custom_call.1} parent=87 // pred_fallthru
          _
      $region88: #{tpu_custom_call.1} parent=5 // pred_fallthru
        _
    $region6: #{tpu_custom_call.1} parent=1 // loop_footer
      %s33 = sadd.s32 1, %s29
    $region7: #{tpu_custom_call.1} parent=1 // loop_footer_branch
      %28 = sbr.rel target = $region3
    $region8: #{tpu_custom_call.1} parent=1 // loop_exit
      _
    %2725 = vsyncpa [#allocation3], 1
    %s2726 = scalar_lea.sflag [#allocation3], 1
    %2727 = vsyncpa %s2726, 1
    %2728 = vsyncpa [#allocation6], 1
    %s2729 = scalar_lea.sflag [#allocation6], 1
    %2730 = vsyncpa %s2729, 1
    %2731 = vsyncpa [#allocation9], 1
    %s2732 = scalar_lea.sflag [#allocation9], 1
    %2733 = vsyncpa %s2732, 1
    %2734 = vsyncpa [#allocation12], 1
    %s2735 = scalar_lea.sflag [#allocation12], 1
    %2736 = vsyncpa %s2735, 1
    %2737 = vsyncpa [#allocation4], 1
    %s2738 = scalar_lea.sflag [#allocation4], 1
    %2739 = vsyncpa %s2738, 1

</llo_original>
